<compile_context>
chip_gen: v7x
topology: tpu7x:2x2x1
jax: 0.10.0
libtpu: 0.0.40
codegen_flags: <defaults>
</compile_context>

<pallas_src>
import math
import functools

import jax
import jax.numpy as jnp
from jax.experimental import pallas as pl
from jax.experimental.pallas import tpu as pltpu


# ---------------------------------------------------------------------------
# Kernel
# ---------------------------------------------------------------------------
def _pos_encoder_kernel(r, pos_ref, rep_ref, phase_ref,
                        w1e_ref, w1p_ref, b1_ref,
                        w2_ref, b2_ref, w3_ref, b3_ref, out_ref):
    """One grid step: a (tm, 3) block of flattened positions.

    With r > 1 the block is processed as r interleaved row groups whose
    results are packed along lanes, giving a 128-lane-wide output block that
    the wrapper unfolds with a free row-major reshape.
    """
    tm = pos_ref.shape[0]
    rows = tm // r

    ys = []
    for k in range(r):                       # static unroll; r in {1, 2, 4, ...}
        if r == 1:
            p = pos_ref[...]
        else:
            # Interleaved group k = rows {k, k+r, k+2r, ...} of this block.
            p = pos_ref[pl.ds(k, rows, stride=r), :]
        p = p.astype(jnp.float32)

        # NeRF embedding: one tiny MXU matmul (K=3) replaces the 2L-way lane
        # concat + broadcast multiply.  cos(x) is folded in as sin(x + pi/2).
        # rep/phase are f32 so freq*p keeps ~f32 accuracy on the MXU.
        arg = jnp.dot(p, rep_ref[...], preferred_element_type=jnp.float32)
        emb = jnp.sin(arg + phase_ref[...])

        # 3-layer MLP: bf16 operands on the MXU, f32 accumulation + f32 biases.
        # W1 is pre-split in the wrapper, so the concat([emb, p]) is gone.
        h = (jnp.dot(emb.astype(jnp.bfloat16), w1e_ref[...],
                     preferred_element_type=jnp.float32)
             + jnp.dot(p.astype(jnp.bfloat16), w1p_ref[...],
                       preferred_element_type=jnp.float32)
             + b1_ref[...])
        h = jnp.maximum(h, 0.0)
        h = jnp.maximum(
            jnp.dot(h.astype(jnp.bfloat16), w2_ref[...],
                    preferred_element_type=jnp.float32) + b2_ref[...], 0.0)
        y = (jnp.dot(h.astype(jnp.bfloat16), w3_ref[...],
                     preferred_element_type=jnp.float32) + b3_ref[...])
        ys.append(y)

    # Lane-dense store: r groups packed along lanes -> 128-wide output rows.
    y = ys[0] if r == 1 else jnp.concatenate(ys, axis=-1)
    out_ref[...] = y.astype(out_ref.dtype)


# ---------------------------------------------------------------------------
# Wrapper
# ---------------------------------------------------------------------------
def _round_up(x, m):
    return ((x + m - 1) // m) * m


def _num_tensorcores():
    """2 on multi-TensorCore chips (v7x / v5p / v4), else 1 (v5e, v6e)."""
    try:
        kind = jax.devices()[0].device_kind.lower()
    except Exception:
        return 1
    return 2 if ("v7" in kind or "v5p" in kind or "v4" in kind) else 1


def positional_encoder_forward(positions, params, *, num_layers_embedding,
                               tm_max=2048):
    """positions: (B, N, 3) -> (B, N, input_size)."""
    B, N, C = positions.shape
    assert C == 3
    M = B * N
    L = num_layers_embedding
    E = 6 * L                                          # sin/cos embedding width

    w1, b1 = params["w1"], params["b1"]
    w2, b2 = params["w2"], params["b2"]
    w3, b3 = params["w3"], params["b3"]
    out_dim = w3.shape[1]

    # ---- constants / weight prep (once, outside the kernel) ----------------
    # rep (3, 6L): column j multiplies coordinate j%3 by freq_{j//6};
    # phase (1, 6L): +pi/2 on the cos columns.  Both stay f32.
    freqs = jnp.asarray(
        [math.pi if i == 0 else 2.0 * math.pi * i for i in range(L)],
        jnp.float32)
    col = jnp.arange(E)
    rep = jnp.zeros((3, E), jnp.float32).at[col % 3, col].set(
        jnp.repeat(freqs, 6))
    phase = jnp.tile(
        jnp.asarray([0.0, 0.0, 0.0, math.pi / 2, math.pi / 2, math.pi / 2],
                    jnp.float32), L)[None, :]
    # W1 split (embedding rows / raw-position rows); MXU operands in bf16.
    w1_emb = w1[:E, :].astype(jnp.bfloat16)            # (6L, h1)
    w1_pos = w1[E:, :].astype(jnp.bfloat16)            # (3,  h1)
    w2_b = w2.astype(jnp.bfloat16)
    w3_b = w3.astype(jnp.bfloat16)

    # ---- lane-dense output fold factor --------------------------------------
    r = 128 // out_dim if (out_dim < 128 and 128 % out_dim == 0) else 1
    if r > 1 and M % r != 0:
        r = 1                                          # fold must be a pure reshape

    # ---- grid / tile sizing --------------------------------------------------
    num_tc = _num_tensorcores()
    sub = 16 if positions.dtype.itemsize < 4 else 8    # sublane tiling of blocks
    align = sub * r                                    # keeps folded out rows aligned
    target_grid = max(pl.cdiv(M, tm_max), num_tc)
    if num_tc > 1:                                     # even split across the 2 TCs
        target_grid = _round_up(target_grid, num_tc)
    tm = _round_up(pl.cdiv(M, target_grid), align)
    if tm > M >= align:                                # keep every block start < M
        tm = (M // align) * align
    grid = pl.cdiv(M, tm)
    M_pad = grid * tm

    pos_flat = positions.reshape(M, 3)
    if M_pad != M:
        # Pad only the cheap input (12 B/row) so padded rows are defined;
        # the output is NOT padded -- Pallas clips the last partial block.
        pos_flat = jnp.pad(pos_flat, ((0, M_pad - M), (0, 0)))

    # ---- pallas_call ---------------------------------------------------------
    kernel = functools.partial(_pos_encoder_kernel, r)

    def const_spec(arr):
        # Full-array block, resident in VMEM across the whole grid.
        return pl.BlockSpec(arr.shape, lambda i: (0, 0))

    if r > 1:
        out_shape = jax.ShapeDtypeStruct((M // r, r * out_dim), positions.dtype)
        out_spec = pl.BlockSpec((tm // r, r * out_dim), lambda i: (i, 0))
    else:
        out_shape = jax.ShapeDtypeStruct((M, out_dim), positions.dtype)
        out_spec = pl.BlockSpec((tm, out_dim), lambda i: (i, 0))

    out = pl.pallas_call(
        kernel,
        out_shape=out_shape,
        grid_spec=pltpu.PrefetchScalarGridSpec(
            num_scalar_prefetch=0,
            grid=(grid,),
            in_specs=[
                pl.BlockSpec((tm, 3), lambda i: (i, 0)),      # positions block
                const_spec(rep), const_spec(phase),
                const_spec(w1_emb), const_spec(w1_pos), const_spec(b1),
                const_spec(w2_b), const_spec(b2),
                const_spec(w3_b), const_spec(b3),
            ],
            out_specs=out_spec,
        ),
        compiler_params=pltpu.CompilerParams(
            dimension_semantics=("parallel",),
            vmem_limit_bytes=32 * 1024 * 1024),
    )(pos_flat, rep, phase, w1_emb, w1_pos, b1, w2_b, b2, w3_b, b3)

    # Undoing the lane fold is a free row-major reshape (no copy, no slice).
    return out.reshape(B, N, out_dim)


# ---------------------------------------------------------------------------
# Deterministic parameter init (shapes from the module's __init__)
# ---------------------------------------------------------------------------
def init_params(key, input_size, num_layers_embedding):
    in_dim = num_layers_embedding * 2 * 3 + 3
    h1 = input_size // 4
    h2 = input_size // 2
    keys = jax.random.split(key, 6)

    def linear(kw, kb, fan_in, fan_out):
        bound = 1.0 / math.sqrt(fan_in)
        w = jax.random.uniform(kw, (fan_in, fan_out), jnp.float32, -bound, bound)
        b = jax.random.uniform(kb, (1, fan_out), jnp.float32, -bound, bound)
        return w, b

    w1, b1 = linear(keys[0], keys[1], in_dim, h1)
    w2, b2 = linear(keys[2], keys[3], h1, h2)
    w3, b3 = linear(keys[4], keys[5], h2, input_size)
    return dict(w1=w1, b1=b1, w2=w2, b2=b2, w3=w3, b3=b3)


# ---------------------------------------------------------------------------
# Pure-JAX references
# ---------------------------------------------------------------------------
def reference_forward(positions, params, *, num_layers_embedding):
    """Exact f32 mirror of the PyTorch module."""
    B, N, _ = positions.shape
    p = positions.reshape(B * N, 3).astype(jnp.float32)
    embs = []
    for i in range(num_layers_embedding):
        freq = math.pi if i == 0 else 2.0 * math.pi * i
        embs.append(jnp.sin(freq * p))
        embs.append(jnp.cos(freq * p))
    x = jnp.concatenate(embs + [p], axis=-1)
    h1 = jnp.maximum(x @ params["w1"] + params["b1"], 0.0)
    h2 = jnp.maximum(h1 @ params["w2"] + params["b2"], 0.0)
    y = h2 @ params["w3"] + params["b3"]
    return y.reshape(B, N, -1)


def reference_forward_bf16(positions, params, *, num_layers_embedding):
    """Same math with bf16 matmul operands / f32 accumulation (matches the
    kernel's MLP numerics) -- used for the tight correctness check."""
    B, N, _ = positions.shape
    p = positions.reshape(B * N, 3).astype(jnp.float32)
    embs = []
    for i in range(num_layers_embedding):
        freq = math.pi if i == 0 else 2.0 * math.pi * i
        embs.append(jnp.sin(freq * p))
        embs.append(jnp.cos(freq * p))
    x = jnp.concatenate(embs + [p], axis=-1)

    def dot_bf16(a, w):
        return jnp.dot(a.astype(jnp.bfloat16), w.astype(jnp.bfloat16),
                       preferred_element_type=jnp.float32)

    h1 = jnp.maximum(dot_bf16(x, params["w1"]) + params["b1"], 0.0)
    h2 = jnp.maximum(dot_bf16(h1, params["w2"]) + params["b2"], 0.0)
    y = dot_bf16(h2, params["w3"]) + params["b3"]
    return y.reshape(B, N, -1)


# ---------------------------------------------------------------------------
if __name__ == "__main__":
    key = jax.random.PRNGKey(0)

    # Config 1: out_dim=64 exercises the lane-dense fold (r=2); ragged M=126
    #           exercises the clipped partial output block.
    # Config 2: out_dim=256 (r=1), larger M, padded input + partial last block.
    for (B, N, input_size, L) in [(2, 63, 64, 4), (3, 500, 256, 3)]:
        key, kpos, kparam = jax.random.split(key, 3)
        positions = jax.random.uniform(kpos, (B, N, 3), jnp.float32, -1.0, 1.0)
        params = init_params(kparam, input_size, L)

        out = positional_encoder_forward(positions, params,
                                         num_layers_embedding=L)
        out = jax.block_until_ready(out)
        assert out.shape == (B, N, input_size)

        # Tight check vs. a bf16-operand reference (same numerics as kernel),
        # looser check vs. the exact f32 reference (bf16 MLP operand rounding).
        ref_bf = reference_forward_bf16(positions, params,
                                        num_layers_embedding=L)
        ref32 = reference_forward(positions, params, num_layers_embedding=L)
        assert jnp.allclose(out, ref_bf, atol=1e-2, rtol=1e-2), (
            "max |out - ref_bf16| =", float(jnp.max(jnp.abs(out - ref_bf))))
        assert jnp.allclose(out, ref32, atol=4e-2, rtol=4e-2), (
            "max |out - ref_f32| =", float(jnp.max(jnp.abs(out - ref32))))

    print("KERNEL_OK")
</pallas_src>

<mosaic_0001>
module attributes {stable_mosaic.version = 11 : i64} {
  func.func @_pos_encoder_kernel(%arg0: i32, %arg1: memref<112x3xf32, #tpu.memory_space<vmem>>, %arg2: memref<3x24xf32, #tpu.memory_space<vmem>>, %arg3: memref<1x24xf32, #tpu.memory_space<vmem>>, %arg4: memref<24x16xbf16, #tpu.memory_space<vmem>>, %arg5: memref<3x16xbf16, #tpu.memory_space<vmem>>, %arg6: memref<1x16xf32, #tpu.memory_space<vmem>>, %arg7: memref<16x32xbf16, #tpu.memory_space<vmem>>, %arg8: memref<1x32xf32, #tpu.memory_space<vmem>>, %arg9: memref<32x64xbf16, #tpu.memory_space<vmem>>, %arg10: memref<1x64xf32, #tpu.memory_space<vmem>>, %arg11: memref<56x128xf32, #tpu.memory_space<vmem>>) attributes {dimension_semantics = [#tpu.dimension_semantics<parallel>], iteration_bounds = array<i64: 2>, scalar_prefetch = 0 : i64, scratch_operands = 0 : i64, tpu.core_type = #tpu.core_type<tc>, window_params = [{transform_indices = @transform_0, window_bounds = array<i64: 112, 3>}, {pipeline_mode = #tpu.pipeline_mode<synchronous>, transform_indices = @transform_1, window_bounds = array<i64: 3, 24>}, {pipeline_mode = #tpu.pipeline_mode<synchronous>, transform_indices = @transform_2, window_bounds = array<i64: 1, 24>}, {pipeline_mode = #tpu.pipeline_mode<synchronous>, transform_indices = @transform_3, window_bounds = array<i64: 24, 16>}, {pipeline_mode = #tpu.pipeline_mode<synchronous>, transform_indices = @transform_4, window_bounds = array<i64: 3, 16>}, {pipeline_mode = #tpu.pipeline_mode<synchronous>, transform_indices = @transform_5, window_bounds = array<i64: 1, 16>}, {pipeline_mode = #tpu.pipeline_mode<synchronous>, transform_indices = @transform_6, window_bounds = array<i64: 16, 32>}, {pipeline_mode = #tpu.pipeline_mode<synchronous>, transform_indices = @transform_7, window_bounds = array<i64: 1, 32>}, {pipeline_mode = #tpu.pipeline_mode<synchronous>, transform_indices = @transform_8, window_bounds = array<i64: 32, 64>}, {pipeline_mode = #tpu.pipeline_mode<synchronous>, transform_indices = @transform_9, window_bounds = array<i64: 1, 64>}, {transform_indices = @transform_10, window_bounds = array<i64: 56, 128>}]} {
    %c0 = arith.constant 0 : index
    %c0_0 = arith.constant 0 : index
    %0 = tpu.strided_load %arg1[%c0, %c0_0] {strides = array<i32: 2, 1>} : memref<112x3xf32, #tpu.memory_space<vmem>>, vector<56x3xf32>
    %c0_1 = arith.constant 0 : index
    %c0_2 = arith.constant 0 : index
    %1 = vector.load %arg2[%c0_1, %c0_2] : memref<3x24xf32, #tpu.memory_space<vmem>>, vector<3x24xf32>
    %cst = arith.constant dense<0.000000e+00> : vector<56x24xf32>
    %2 = tpu.matmul %0, %1, %cst {dimension_numbers = #tpu.dot_dimension_numbers<[1], [0], [0], [1], [0, 0, 1, 1], [], []>} : vector<56x3xf32>, vector<3x24xf32>, vector<56x24xf32> -> vector<56x24xf32>
    %c0_3 = arith.constant 0 : index
    %c0_4 = arith.constant 0 : index
    %3 = vector.load %arg3[%c0_3, %c0_4] : memref<1x24xf32, #tpu.memory_space<vmem>>, vector<1x24xf32>
    %4 = vector.broadcast %3 : vector<1x24xf32> to vector<56x24xf32>
    %5 = arith.addf %2, %4 : vector<56x24xf32>
    %6 = math.sin %5 : vector<56x24xf32>
    %7 = arith.truncf %6 : vector<56x24xf32> to vector<56x24xbf16>
    %c0_5 = arith.constant 0 : index
    %c0_6 = arith.constant 0 : index
    %8 = vector.load %arg4[%c0_5, %c0_6] : memref<24x16xbf16, #tpu.memory_space<vmem>>, vector<24x16xbf16>
    %cst_7 = arith.constant dense<0.000000e+00> : vector<56x16xf32>
    %9 = tpu.matmul %7, %8, %cst_7 {dimension_numbers = #tpu.dot_dimension_numbers<[1], [0], [0], [1], [0, 0, 1, 1], [], []>} : vector<56x24xbf16>, vector<24x16xbf16>, vector<56x16xf32> -> vector<56x16xf32>
    %10 = arith.truncf %0 : vector<56x3xf32> to vector<56x3xbf16>
    %c0_8 = arith.constant 0 : index
    %c0_9 = arith.constant 0 : index
    %11 = vector.load %arg5[%c0_8, %c0_9] : memref<3x16xbf16, #tpu.memory_space<vmem>>, vector<3x16xbf16>
    %cst_10 = arith.constant dense<0.000000e+00> : vector<56x16xf32>
    %12 = tpu.matmul %10, %11, %cst_10 {dimension_numbers = #tpu.dot_dimension_numbers<[1], [0], [0], [1], [0, 0, 1, 1], [], []>} : vector<56x3xbf16>, vector<3x16xbf16>, vector<56x16xf32> -> vector<56x16xf32>
    %13 = arith.addf %9, %12 : vector<56x16xf32>
    %c0_11 = arith.constant 0 : index
    %c0_12 = arith.constant 0 : index
    %14 = vector.load %arg6[%c0_11, %c0_12] : memref<1x16xf32, #tpu.memory_space<vmem>>, vector<1x16xf32>
    %15 = vector.broadcast %14 : vector<1x16xf32> to vector<56x16xf32>
    %16 = arith.addf %13, %15 : vector<56x16xf32>
    %cst_13 = arith.constant 0.000000e+00 : f32
    %17 = vector.broadcast %cst_13 : f32 to vector<56x16xf32>
    %18 = arith.maximumf %16, %17 : vector<56x16xf32>
    %19 = arith.truncf %18 : vector<56x16xf32> to vector<56x16xbf16>
    %c0_14 = arith.constant 0 : index
    %c0_15 = arith.constant 0 : index
    %20 = vector.load %arg7[%c0_14, %c0_15] : memref<16x32xbf16, #tpu.memory_space<vmem>>, vector<16x32xbf16>
    %cst_16 = arith.constant dense<0.000000e+00> : vector<56x32xf32>
    %21 = tpu.matmul %19, %20, %cst_16 {dimension_numbers = #tpu.dot_dimension_numbers<[1], [0], [0], [1], [0, 0, 1, 1], [], []>} : vector<56x16xbf16>, vector<16x32xbf16>, vector<56x32xf32> -> vector<56x32xf32>
    %c0_17 = arith.constant 0 : index
    %c0_18 = arith.constant 0 : index
    %22 = vector.load %arg8[%c0_17, %c0_18] : memref<1x32xf32, #tpu.memory_space<vmem>>, vector<1x32xf32>
    %23 = vector.broadcast %22 : vector<1x32xf32> to vector<56x32xf32>
    %24 = arith.addf %21, %23 : vector<56x32xf32>
    %cst_19 = arith.constant 0.000000e+00 : f32
    %25 = vector.broadcast %cst_19 : f32 to vector<56x32xf32>
    %26 = arith.maximumf %24, %25 : vector<56x32xf32>
    %27 = arith.truncf %26 : vector<56x32xf32> to vector<56x32xbf16>
    %c0_20 = arith.constant 0 : index
    %c0_21 = arith.constant 0 : index
    %28 = vector.load %arg9[%c0_20, %c0_21] : memref<32x64xbf16, #tpu.memory_space<vmem>>, vector<32x64xbf16>
    %cst_22 = arith.constant dense<0.000000e+00> : vector<56x64xf32>
    %29 = tpu.matmul %27, %28, %cst_22 {dimension_numbers = #tpu.dot_dimension_numbers<[1], [0], [0], [1], [0, 0, 1, 1], [], []>} : vector<56x32xbf16>, vector<32x64xbf16>, vector<56x64xf32> -> vector<56x64xf32>
    %c0_23 = arith.constant 0 : index
    %c0_24 = arith.constant 0 : index
    %30 = vector.load %arg10[%c0_23, %c0_24] : memref<1x64xf32, #tpu.memory_space<vmem>>, vector<1x64xf32>
    %31 = vector.broadcast %30 : vector<1x64xf32> to vector<56x64xf32>
    %32 = arith.addf %29, %31 : vector<56x64xf32>
    %c1 = arith.constant 1 : index
    %c0_25 = arith.constant 0 : index
    %33 = tpu.strided_load %arg1[%c1, %c0_25] {strides = array<i32: 2, 1>} : memref<112x3xf32, #tpu.memory_space<vmem>>, vector<56x3xf32>
    %c0_26 = arith.constant 0 : index
    %c0_27 = arith.constant 0 : index
    %34 = vector.load %arg2[%c0_26, %c0_27] : memref<3x24xf32, #tpu.memory_space<vmem>>, vector<3x24xf32>
    %cst_28 = arith.constant dense<0.000000e+00> : vector<56x24xf32>
    %35 = tpu.matmul %33, %34, %cst_28 {dimension_numbers = #tpu.dot_dimension_numbers<[1], [0], [0], [1], [0, 0, 1, 1], [], []>} : vector<56x3xf32>, vector<3x24xf32>, vector<56x24xf32> -> vector<56x24xf32>
    %c0_29 = arith.constant 0 : index
    %c0_30 = arith.constant 0 : index
    %36 = vector.load %arg3[%c0_29, %c0_30] : memref<1x24xf32, #tpu.memory_space<vmem>>, vector<1x24xf32>
    %37 = vector.broadcast %36 : vector<1x24xf32> to vector<56x24xf32>
    %38 = arith.addf %35, %37 : vector<56x24xf32>
    %39 = math.sin %38 : vector<56x24xf32>
    %40 = arith.truncf %39 : vector<56x24xf32> to vector<56x24xbf16>
    %c0_31 = arith.constant 0 : index
    %c0_32 = arith.constant 0 : index
    %41 = vector.load %arg4[%c0_31, %c0_32] : memref<24x16xbf16, #tpu.memory_space<vmem>>, vector<24x16xbf16>
    %cst_33 = arith.constant dense<0.000000e+00> : vector<56x16xf32>
    %42 = tpu.matmul %40, %41, %cst_33 {dimension_numbers = #tpu.dot_dimension_numbers<[1], [0], [0], [1], [0, 0, 1, 1], [], []>} : vector<56x24xbf16>, vector<24x16xbf16>, vector<56x16xf32> -> vector<56x16xf32>
    %43 = arith.truncf %33 : vector<56x3xf32> to vector<56x3xbf16>
    %c0_34 = arith.constant 0 : index
    %c0_35 = arith.constant 0 : index
    %44 = vector.load %arg5[%c0_34, %c0_35] : memref<3x16xbf16, #tpu.memory_space<vmem>>, vector<3x16xbf16>
    %cst_36 = arith.constant dense<0.000000e+00> : vector<56x16xf32>
    %45 = tpu.matmul %43, %44, %cst_36 {dimension_numbers = #tpu.dot_dimension_numbers<[1], [0], [0], [1], [0, 0, 1, 1], [], []>} : vector<56x3xbf16>, vector<3x16xbf16>, vector<56x16xf32> -> vector<56x16xf32>
    %46 = arith.addf %42, %45 : vector<56x16xf32>
    %c0_37 = arith.constant 0 : index
    %c0_38 = arith.constant 0 : index
    %47 = vector.load %arg6[%c0_37, %c0_38] : memref<1x16xf32, #tpu.memory_space<vmem>>, vector<1x16xf32>
    %48 = vector.broadcast %47 : vector<1x16xf32> to vector<56x16xf32>
    %49 = arith.addf %46, %48 : vector<56x16xf32>
    %cst_39 = arith.constant 0.000000e+00 : f32
    %50 = vector.broadcast %cst_39 : f32 to vector<56x16xf32>
    %51 = arith.maximumf %49, %50 : vector<56x16xf32>
    %52 = arith.truncf %51 : vector<56x16xf32> to vector<56x16xbf16>
    %c0_40 = arith.constant 0 : index
    %c0_41 = arith.constant 0 : index
    %53 = vector.load %arg7[%c0_40, %c0_41] : memref<16x32xbf16, #tpu.memory_space<vmem>>, vector<16x32xbf16>
    %cst_42 = arith.constant dense<0.000000e+00> : vector<56x32xf32>
    %54 = tpu.matmul %52, %53, %cst_42 {dimension_numbers = #tpu.dot_dimension_numbers<[1], [0], [0], [1], [0, 0, 1, 1], [], []>} : vector<56x16xbf16>, vector<16x32xbf16>, vector<56x32xf32> -> vector<56x32xf32>
    %c0_43 = arith.constant 0 : index
    %c0_44 = arith.constant 0 : index
    %55 = vector.load %arg8[%c0_43, %c0_44] : memref<1x32xf32, #tpu.memory_space<vmem>>, vector<1x32xf32>
    %56 = vector.broadcast %55 : vector<1x32xf32> to vector<56x32xf32>
    %57 = arith.addf %54, %56 : vector<56x32xf32>
    %cst_45 = arith.constant 0.000000e+00 : f32
    %58 = vector.broadcast %cst_45 : f32 to vector<56x32xf32>
    %59 = arith.maximumf %57, %58 : vector<56x32xf32>
    %60 = arith.truncf %59 : vector<56x32xf32> to vector<56x32xbf16>
    %c0_46 = arith.constant 0 : index
    %c0_47 = arith.constant 0 : index
    %61 = vector.load %arg9[%c0_46, %c0_47] : memref<32x64xbf16, #tpu.memory_space<vmem>>, vector<32x64xbf16>
    %cst_48 = arith.constant dense<0.000000e+00> : vector<56x64xf32>
    %62 = tpu.matmul %60, %61, %cst_48 {dimension_numbers = #tpu.dot_dimension_numbers<[1], [0], [0], [1], [0, 0, 1, 1], [], []>} : vector<56x32xbf16>, vector<32x64xbf16>, vector<56x64xf32> -> vector<56x64xf32>
    %c0_49 = arith.constant 0 : index
    %c0_50 = arith.constant 0 : index
    %63 = vector.load %arg10[%c0_49, %c0_50] : memref<1x64xf32, #tpu.memory_space<vmem>>, vector<1x64xf32>
    %64 = vector.broadcast %63 : vector<1x64xf32> to vector<56x64xf32>
    %65 = arith.addf %62, %64 : vector<56x64xf32>
    %66 = tpu.concatenate %32, %65 in 1 : vector<56x64xf32>, vector<56x64xf32> -> vector<56x128xf32>
    %c0_51 = arith.constant 0 : index
    %c0_52 = arith.constant 0 : index
    %67 = vector.load %arg11[%c0_51, %c0_52] : memref<56x128xf32, #tpu.memory_space<vmem>>, vector<56x128xf32>
    tpu.vector_store %arg11[%c0_51, %c0_52], %66 {strides = array<i32>} : memref<56x128xf32, #tpu.memory_space<vmem>>, vector<56x128xf32>,
    return
  }
  func.func @transform_0(%arg0: i32) -> (i32, i32) {
    %c0_i32 = arith.constant 0 : i32
    %c0_i32_0 = arith.constant 0 : i32
    return %arg0, %c0_i32 : i32, i32
  }
  func.func @transform_1(%arg0: i32) -> (i32, i32) {
    %c0_i32 = arith.constant 0 : i32
    %c0_i32_0 = arith.constant 0 : i32
    %c0_i32_1 = arith.constant 0 : i32
    return %c0_i32, %c0_i32_0 : i32, i32
  }
  func.func @transform_2(%arg0: i32) -> (i32, i32) {
    %c0_i32 = arith.constant 0 : i32
    %c0_i32_0 = arith.constant 0 : i32
    %c0_i32_1 = arith.constant 0 : i32
    return %c0_i32, %c0_i32_0 : i32, i32
  }
  func.func @transform_3(%arg0: i32) -> (i32, i32) {
    %c0_i32 = arith.constant 0 : i32
    %c0_i32_0 = arith.constant 0 : i32
    %c0_i32_1 = arith.constant 0 : i32
    return %c0_i32, %c0_i32_0 : i32, i32
  }
  func.func @transform_4(%arg0: i32) -> (i32, i32) {
    %c0_i32 = arith.constant 0 : i32
    %c0_i32_0 = arith.constant 0 : i32
    %c0_i32_1 = arith.constant 0 : i32
    return %c0_i32, %c0_i32_0 : i32, i32
  }
  func.func @transform_5(%arg0: i32) -> (i32, i32) {
    %c0_i32 = arith.constant 0 : i32
    %c0_i32_0 = arith.constant 0 : i32
    %c0_i32_1 = arith.constant 0 : i32
    return %c0_i32, %c0_i32_0 : i32, i32
  }
  func.func @transform_6(%arg0: i32) -> (i32, i32) {
    %c0_i32 = arith.constant 0 : i32
    %c0_i32_0 = arith.constant 0 : i32
    %c0_i32_1 = arith.constant 0 : i32
    return %c0_i32, %c0_i32_0 : i32, i32
  }
  func.func @transform_7(%arg0: i32) -> (i32, i32) {
    %c0_i32 = arith.constant 0 : i32
    %c0_i32_0 = arith.constant 0 : i32
    %c0_i32_1 = arith.constant 0 : i32
    return %c0_i32, %c0_i32_0 : i32, i32
  }
  func.func @transform_8(%arg0: i32) -> (i32, i32) {
    %c0_i32 = arith.constant 0 : i32
    %c0_i32_0 = arith.constant 0 : i32
    %c0_i32_1 = arith.constant 0 : i32
    return %c0_i32, %c0_i32_0 : i32, i32
  }
  func.func @transform_9(%arg0: i32) -> (i32, i32) {
    %c0_i32 = arith.constant 0 : i32
    %c0_i32_0 = arith.constant 0 : i32
    %c0_i32_1 = arith.constant 0 : i32
    return %c0_i32, %c0_i32_0 : i32, i32
  }
  func.func @transform_10(%arg0: i32) -> (i32, i32) {
    %c0_i32 = arith.constant 0 : i32
    %c0_i32_0 = arith.constant 0 : i32
    return %arg0, %c0_i32 : i32, i32
  }
}

</mosaic_0001>

<llo_original>
// kernel: tpu_custom_call.1
$region0: #{tpu_custom_call.1}
  #allocation0 [shape = 'u32[]', space=smem, size = 0x4, offset = 0x4, fixed_abs, tag = 'smem constant byte address 0x4 - core index']
  #allocation1 [shape = 'u32[144,128]{1,0:T(1,128)}', space=vmem, size = 0x12000, scoped, tag = 'internal scratch']
  %s0 = inlined_call_operand.vmem [shape: f32[224,3], index: 0, kind: input, shape index: {}]
  %s1 = inlined_call_operand.vmem [shape: f32[3,24], index: 1, kind: input, shape index: {}]
  %s2 = inlined_call_operand.vmem [shape: f32[1,24], index: 2, kind: input, shape index: {}]
  %s3 = inlined_call_operand.vmem [shape: bf16[24,16], index: 3, kind: input, shape index: {}]
  %s4 = inlined_call_operand.vmem [shape: bf16[3,16], index: 4, kind: input, shape index: {}]
  %s5 = inlined_call_operand.vmem [shape: f32[1,16], index: 5, kind: input, shape index: {}]
  %s6 = inlined_call_operand.vmem [shape: bf16[16,32], index: 6, kind: input, shape index: {}]
  %s7 = inlined_call_operand.vmem [shape: f32[1,32], index: 7, kind: input, shape index: {}]
  %s8 = inlined_call_operand.vmem [shape: bf16[32,64], index: 8, kind: input, shape index: {}]
  %s9 = inlined_call_operand.vmem [shape: f32[1,64], index: 9, kind: input, shape index: {}]
  %s10 = inlined_call_operand.hbm [shape: f32[63,128], index: 10, kind: output, shape index: {}]
  %s11 = sld [smem:[#allocation0]]
  $region73: #{tpu_custom_call.1} parent=0
    _
  %s13 = ssub.s32 1, %s11
  %s14 = scalar_select 0, %s13, %s11
  $region1: #{tpu_custom_call.1} parent=0
    #allocation2 [shape = 'u8[57344]{0}', space=vmem, size = 0xe000, scoped, tag = 'output window, operand 0']
    #allocation3 [shape = 's32[2]{0}', space=sflag, size = 0x8, scoped, tag = 'scoped memory for tpu_custom_call.1']
    %15 = vsyncpa [#allocation3], 0
    %s16 = scalar_lea.sflag [#allocation3], 1
    %17 = vsyncpa %s16, 0
    loop: start=0, step=1, limit=4
    $region2: #{tpu_custom_call.1} parent=1 // loop_pre_header
      _
    $region3: #{tpu_custom_call.1} parent=1 // loop_header
      %s19 = sphi 0, %s23
      %p20 = scmp.ge.s32.totalorder %s19, 4
      %s29 = sphi 0, %s31
      %s32 = sphi 0, %s29
      %s33 = sphi 0, %s32
      %s49 = sphi 0, %s33
      %s53 = sphi 0, %s53
      %s55 = sphi 0, %s53
      %s56 = sphi 0, %s55
      %s70 = sphi 0, %s56
      %s74 = sphi 0, %s74
      %s76 = sphi 0, %s74
      %s77 = sphi 0, %s76
      %s91 = sphi 0, %s77
      %s95 = sphi 0, %s95
      %s97 = sphi 0, %s95
      %s98 = sphi 0, %s97
      %s112 = sphi 0, %s98
      %s116 = sphi 0, %s116
      %s118 = sphi 0, %s116
      %s119 = sphi 0, %s118
      %s133 = sphi 0, %s119
      %s137 = sphi 0, %s137
      %s139 = sphi 0, %s137
      %s140 = sphi 0, %s139
      %s154 = sphi 0, %s140
      %s158 = sphi 0, %s158
      %s160 = sphi 0, %s158
      %s161 = sphi 0, %s160
      %s175 = sphi 0, %s161
      %s179 = sphi 0, %s179
      %s181 = sphi 0, %s179
      %s182 = sphi 0, %s181
      %s196 = sphi 0, %s182
      %s200 = sphi 0, %s200
      %s202 = sphi 0, %s200
      %s203 = sphi 0, %s202
      %s217 = sphi 0, %s203
      %s221 = sphi 0, %s221
      %s223 = sphi 0, %s221
      %s224 = sphi 0, %s223
      %s238 = sphi 0, %s224
      %s244 = sphi 0, %s246
      %s247 = sphi 0, %s244
      %s248 = sphi 0, %s247
      %s264 = sphi 0, %s248
    $region4: #{tpu_custom_call.1} parent=1 // loop_header_branch
      %22 = sbr.rel (%p20) target = $region8
    $region5: #{tpu_custom_call.1} parent=1 // loop_body
      %s24 = ssub.s32 %s19, 1
      %s25 = ssub.s32 %s19, 2
      %s26 = sadd.s32 %s19, 1
      %s27 = ssub.s32 %s19, %s26
      %p28 = scmp.eq.s32.totalorder %s27, 0
      %s30 = sadd.s32 %s29, 1
      %s31 = scalar_select %p28, %s29, %s30
      %p34 = pneg %p28
      %p35 = scmp.eq.s32.totalorder %s19, 1
      %p36 = por %p34, %p35
      %p37 = scmp.ne.s32.totalorder %s29, %s32
      %p38 = scmp.eq.s32.totalorder %s19, 0
      %p39 = por %p37, %p38
      %p40 = scmp.ne.s32.totalorder %s29, %s32
      %p41 = scmp.eq.s32.totalorder %s24, 1
      %p42 = por %p40, %p41
      %p43 = scmp.ne.s32.totalorder %s32, %s33
      %p44 = scmp.eq.s32.totalorder %s24, 0
      %p45 = por %p43, %p44
      %p46 = scmp.ne.s32.totalorder %s32, %s33
      %p47 = scmp.eq.s32.totalorder %s25, 1
      %p48 = por %p46, %p47
      %p50 = scmp.ne.s32.totalorder %s33, %s49
      %p51 = scmp.eq.s32.totalorder %s25, 0
      %p52 = por %p50, %p51
      %s54 = sadd.s32 %s53, 1
      %p57 = scmp.eq.s32.totalorder %s19, 1
      %p58 = scmp.ne.s32.totalorder %s53, %s55
      %p59 = scmp.eq.s32.totalorder %s19, 0
      %p60 = por %p58, %p59
      %p61 = scmp.ne.s32.totalorder %s53, %s55
      %p62 = scmp.eq.s32.totalorder %s24, 1
      %p63 = por %p61, %p62
      %p64 = scmp.ne.s32.totalorder %s55, %s56
      %p65 = scmp.eq.s32.totalorder %s24, 0
      %p66 = por %p64, %p65
      %p67 = scmp.ne.s32.totalorder %s55, %s56
      %p68 = scmp.eq.s32.totalorder %s25, 1
      %p69 = por %p67, %p68
      %p71 = scmp.ne.s32.totalorder %s56, %s70
      %p72 = scmp.eq.s32.totalorder %s25, 0
      %p73 = por %p71, %p72
      %s75 = sadd.s32 %s74, 1
      %p78 = scmp.eq.s32.totalorder %s19, 1
      %p79 = scmp.ne.s32.totalorder %s74, %s76
      %p80 = scmp.eq.s32.totalorder %s19, 0
      %p81 = por %p79, %p80
      %p82 = scmp.ne.s32.totalorder %s74, %s76
      %p83 = scmp.eq.s32.totalorder %s24, 1
      %p84 = por %p82, %p83
      %p85 = scmp.ne.s32.totalorder %s76, %s77
      %p86 = scmp.eq.s32.totalorder %s24, 0
      %p87 = por %p85, %p86
      %p88 = scmp.ne.s32.totalorder %s76, %s77
      %p89 = scmp.eq.s32.totalorder %s25, 1
      %p90 = por %p88, %p89
      %p92 = scmp.ne.s32.totalorder %s77, %s91
      %p93 = scmp.eq.s32.totalorder %s25, 0
      %p94 = por %p92, %p93
      %s96 = sadd.s32 %s95, 1
      %p99 = scmp.eq.s32.totalorder %s19, 1
      %p100 = scmp.ne.s32.totalorder %s95, %s97
      %p101 = scmp.eq.s32.totalorder %s19, 0
      %p102 = por %p100, %p101
      %p103 = scmp.ne.s32.totalorder %s95, %s97
      %p104 = scmp.eq.s32.totalorder %s24, 1
      %p105 = por %p103, %p104
      %p106 = scmp.ne.s32.totalorder %s97, %s98
      %p107 = scmp.eq.s32.totalorder %s24, 0
      %p108 = por %p106, %p107
      %p109 = scmp.ne.s32.totalorder %s97, %s98
      %p110 = scmp.eq.s32.totalorder %s25, 1
      %p111 = por %p109, %p110
      %p113 = scmp.ne.s32.totalorder %s98, %s112
      %p114 = scmp.eq.s32.totalorder %s25, 0
      %p115 = por %p113, %p114
      %s117 = sadd.s32 %s116, 1
      %p120 = scmp.eq.s32.totalorder %s19, 1
      %p121 = scmp.ne.s32.totalorder %s116, %s118
      %p122 = scmp.eq.s32.totalorder %s19, 0
      %p123 = por %p121, %p122
      %p124 = scmp.ne.s32.totalorder %s116, %s118
      %p125 = scmp.eq.s32.totalorder %s24, 1
      %p126 = por %p124, %p125
      %p127 = scmp.ne.s32.totalorder %s118, %s119
      %p128 = scmp.eq.s32.totalorder %s24, 0
      %p129 = por %p127, %p128
      %p130 = scmp.ne.s32.totalorder %s118, %s119
      %p131 = scmp.eq.s32.totalorder %s25, 1
      %p132 = por %p130, %p131
      %p134 = scmp.ne.s32.totalorder %s119, %s133
      %p135 = scmp.eq.s32.totalorder %s25, 0
      %p136 = por %p134, %p135
      %s138 = sadd.s32 %s137, 1
      %p141 = scmp.eq.s32.totalorder %s19, 1
      %p142 = scmp.ne.s32.totalorder %s137, %s139
      %p143 = scmp.eq.s32.totalorder %s19, 0
      %p144 = por %p142, %p143
      %p145 = scmp.ne.s32.totalorder %s137, %s139
      %p146 = scmp.eq.s32.totalorder %s24, 1
      %p147 = por %p145, %p146
      %p148 = scmp.ne.s32.totalorder %s139, %s140
      %p149 = scmp.eq.s32.totalorder %s24, 0
      %p150 = por %p148, %p149
      %p151 = scmp.ne.s32.totalorder %s139, %s140
      %p152 = scmp.eq.s32.totalorder %s25, 1
      %p153 = por %p151, %p152
      %p155 = scmp.ne.s32.totalorder %s140, %s154
      %p156 = scmp.eq.s32.totalorder %s25, 0
      %p157 = por %p155, %p156
      %s159 = sadd.s32 %s158, 1
      %p162 = scmp.eq.s32.totalorder %s19, 1
      %p163 = scmp.ne.s32.totalorder %s158, %s160
      %p164 = scmp.eq.s32.totalorder %s19, 0
      %p165 = por %p163, %p164
      %p166 = scmp.ne.s32.totalorder %s158, %s160
      %p167 = scmp.eq.s32.totalorder %s24, 1
      %p168 = por %p166, %p167
      %p169 = scmp.ne.s32.totalorder %s160, %s161
      %p170 = scmp.eq.s32.totalorder %s24, 0
      %p171 = por %p169, %p170
      %p172 = scmp.ne.s32.totalorder %s160, %s161
      %p173 = scmp.eq.s32.totalorder %s25, 1
      %p174 = por %p172, %p173
      %p176 = scmp.ne.s32.totalorder %s161, %s175
      %p177 = scmp.eq.s32.totalorder %s25, 0
      %p178 = por %p176, %p177
      %s180 = sadd.s32 %s179, 1
      %p183 = scmp.eq.s32.totalorder %s19, 1
      %p184 = scmp.ne.s32.totalorder %s179, %s181
      %p185 = scmp.eq.s32.totalorder %s19, 0
      %p186 = por %p184, %p185
      %p187 = scmp.ne.s32.totalorder %s179, %s181
      %p188 = scmp.eq.s32.totalorder %s24, 1
      %p189 = por %p187, %p188
      %p190 = scmp.ne.s32.totalorder %s181, %s182
      %p191 = scmp.eq.s32.totalorder %s24, 0
      %p192 = por %p190, %p191
      %p193 = scmp.ne.s32.totalorder %s181, %s182
      %p194 = scmp.eq.s32.totalorder %s25, 1
      %p195 = por %p193, %p194
      %p197 = scmp.ne.s32.totalorder %s182, %s196
      %p198 = scmp.eq.s32.totalorder %s25, 0
      %p199 = por %p197, %p198
      %s201 = sadd.s32 %s200, 1
      %p204 = scmp.eq.s32.totalorder %s19, 1
      %p205 = scmp.ne.s32.totalorder %s200, %s202
      %p206 = scmp.eq.s32.totalorder %s19, 0
      %p207 = por %p205, %p206
      %p208 = scmp.ne.s32.totalorder %s200, %s202
      %p209 = scmp.eq.s32.totalorder %s24, 1
      %p210 = por %p208, %p209
      %p211 = scmp.ne.s32.totalorder %s202, %s203
      %p212 = scmp.eq.s32.totalorder %s24, 0
      %p213 = por %p211, %p212
      %p214 = scmp.ne.s32.totalorder %s202, %s203
      %p215 = scmp.eq.s32.totalorder %s25, 1
      %p216 = por %p214, %p215
      %p218 = scmp.ne.s32.totalorder %s203, %s217
      %p219 = scmp.eq.s32.totalorder %s25, 0
      %p220 = por %p218, %p219
      %s222 = sadd.s32 %s221, 1
      %p225 = scmp.eq.s32.totalorder %s19, 1
      %p226 = scmp.ne.s32.totalorder %s221, %s223
      %p227 = scmp.eq.s32.totalorder %s19, 0
      %p228 = por %p226, %p227
      %p229 = scmp.ne.s32.totalorder %s221, %s223
      %p230 = scmp.eq.s32.totalorder %s24, 1
      %p231 = por %p229, %p230
      %p232 = scmp.ne.s32.totalorder %s223, %s224
      %p233 = scmp.eq.s32.totalorder %s24, 0
      %p234 = por %p232, %p233
      %p235 = scmp.ne.s32.totalorder %s223, %s224
      %p236 = scmp.eq.s32.totalorder %s25, 1
      %p237 = por %p235, %p236
      %p239 = scmp.ne.s32.totalorder %s224, %s238
      %p240 = scmp.eq.s32.totalorder %s25, 0
      %p241 = por %p239, %p240
      %s242 = ssub.s32 %s19, %s26
      %p243 = scmp.eq.s32.totalorder %s242, 0
      %s245 = sadd.s32 %s244, 1
      %s246 = scalar_select %p243, %s244, %s245
      %p249 = pneg %p243
      %p250 = scmp.eq.s32.totalorder %s19, 1
      %p251 = por %p249, %p250
      %p252 = scmp.ne.s32.totalorder %s244, %s247
      %p253 = scmp.eq.s32.totalorder %s19, 0
      %p254 = por %p252, %p253
      %p255 = scmp.ne.s32.totalorder %s244, %s247
      %p256 = scmp.eq.s32.totalorder %s24, 1
      %p257 = por %p255, %p256
      %p258 = scmp.ne.s32.totalorder %s247, %s248
      %p259 = scmp.eq.s32.totalorder %s24, 0
      %p260 = por %p258, %p259
      %p261 = scmp.ne.s32.totalorder %s247, %s248
      %p262 = scmp.eq.s32.totalorder %s25, 1
      %p263 = por %p261, %p262
      %p265 = scmp.ne.s32.totalorder %s248, %s264
      %p266 = scmp.eq.s32.totalorder %s25, 0
      %p267 = por %p265, %p266
      %p268 = scmp.le.s32.totalorder 1, %s19
      %p269 = scmp.lt.s32.totalorder %s19, 3
      %p270 = pnand %p268, %p269
      %p271 = pneg %p270
      // Predicated region
      $region9: #{tpu_custom_call.1} parent=5 // pred_check
        _
      $region10: #{tpu_custom_call.1} parent=5 // pred_check_branch
        %273 = sbr.rel (%p270) target = $region12
      $region11: #{tpu_custom_call.1} parent=5 // pred_region
        %s274 = ssub.s32 %s19, 1
        // Predicated region
        $region13: #{tpu_custom_call.1} parent=11 // pred_check
          %p275 = pneg %p66
        $region14: #{tpu_custom_call.1} parent=11 // pred_check_branch
          %277 = sbr.rel (%p275) target = $region16
        $region15: #{tpu_custom_call.1} parent=11 // pred_region
          _
        $region16: #{tpu_custom_call.1} parent=11 // pred_fallthru
          _
        // Predicated region
        $region17: #{tpu_custom_call.1} parent=11 // pred_check
          %p278 = pneg %p87
        $region18: #{tpu_custom_call.1} parent=11 // pred_check_branch
          %280 = sbr.rel (%p278) target = $region20
        $region19: #{tpu_custom_call.1} parent=11 // pred_region
          _
        $region20: #{tpu_custom_call.1} parent=11 // pred_fallthru
          _
        // Predicated region
        $region21: #{tpu_custom_call.1} parent=11 // pred_check
          %p281 = pneg %p108
        $region22: #{tpu_custom_call.1} parent=11 // pred_check_branch
          %283 = sbr.rel (%p281) target = $region24
        $region23: #{tpu_custom_call.1} parent=11 // pred_region
          _
        $region24: #{tpu_custom_call.1} parent=11 // pred_fallthru
          _
        // Predicated region
        $region25: #{tpu_custom_call.1} parent=11 // pred_check
          %p284 = pneg %p129
        $region26: #{tpu_custom_call.1} parent=11 // pred_check_branch
          %286 = sbr.rel (%p284) target = $region28
        $region27: #{tpu_custom_call.1} parent=11 // pred_region
          _
        $region28: #{tpu_custom_call.1} parent=11 // pred_fallthru
          _
        // Predicated region
        $region29: #{tpu_custom_call.1} parent=11 // pred_check
          %p287 = pneg %p150
        $region30: #{tpu_custom_call.1} parent=11 // pred_check_branch
          %289 = sbr.rel (%p287) target = $region32
        $region31: #{tpu_custom_call.1} parent=11 // pred_region
          _
        $region32: #{tpu_custom_call.1} parent=11 // pred_fallthru
          _
        // Predicated region
        $region33: #{tpu_custom_call.1} parent=11 // pred_check
          %p290 = pneg %p171
        $region34: #{tpu_custom_call.1} parent=11 // pred_check_branch
          %292 = sbr.rel (%p290) target = $region36
        $region35: #{tpu_custom_call.1} parent=11 // pred_region
          _
        $region36: #{tpu_custom_call.1} parent=11 // pred_fallthru
          _
        // Predicated region
        $region37: #{tpu_custom_call.1} parent=11 // pred_check
          %p293 = pneg %p192
        $region38: #{tpu_custom_call.1} parent=11 // pred_check_branch
          %295 = sbr.rel (%p293) target = $region40
        $region39: #{tpu_custom_call.1} parent=11 // pred_region
          _
        $region40: #{tpu_custom_call.1} parent=11 // pred_fallthru
          _
        // Predicated region
        $region41: #{tpu_custom_call.1} parent=11 // pred_check
          %p296 = pneg %p213
        $region42: #{tpu_custom_call.1} parent=11 // pred_check_branch
          %298 = sbr.rel (%p296) target = $region44
        $region43: #{tpu_custom_call.1} parent=11 // pred_region
          _
        $region44: #{tpu_custom_call.1} parent=11 // pred_fallthru
          _
        // Predicated region
        $region45: #{tpu_custom_call.1} parent=11 // pred_check
          %p299 = pneg %p234
        $region46: #{tpu_custom_call.1} parent=11 // pred_check_branch
          %301 = sbr.rel (%p299) target = $region48
        $region47: #{tpu_custom_call.1} parent=11 // pred_region
          _
        $region48: #{tpu_custom_call.1} parent=11 // pred_fallthru
          _
      $region12: #{tpu_custom_call.1} parent=5 // pred_fallthru
        _
      %p302 = scmp.lt.s32.totalorder %s19, 2
      // Predicated region
      $region49: #{tpu_custom_call.1} parent=5 // pred_check
        %p303 = pneg %p302
      $region50: #{tpu_custom_call.1} parent=5 // pred_check_branch
        %305 = sbr.rel (%p303) target = $region52
      $region51: #{tpu_custom_call.1} parent=5 // pred_region
        // Predicated region
        $region53: #{tpu_custom_call.1} parent=51 // pred_check
          %p306 = pneg %p39
        $region54: #{tpu_custom_call.1} parent=51 // pred_check_branch
          %308 = sbr.rel (%p306) target = $region56
        $region55: #{tpu_custom_call.1} parent=51 // pred_region
          %s309 = smul.u32 14, %s19
          %p310 = scmp.lt.s32.totalorder %s309, 27
          %s311 = scalar_select %p310, %s309, 27
          %s312 = smul.addr %s311, 8
          %s313 = scalar_lea.vmem %s0, %s312
          %s314 = smul.u32 14, %s19
        $region56: #{tpu_custom_call.1} parent=51 // pred_fallthru
          _
      $region52: #{tpu_custom_call.1} parent=5 // pred_fallthru
        _
      %p315 = scmp.le.s32.totalorder 1, %s19
      %p316 = scmp.lt.s32.totalorder %s19, 3
      %p317 = pnand %p315, %p316
      %p318 = pneg %p317
      // Predicated region
      $region57: #{tpu_custom_call.1} parent=5 // pred_check
        _
      $region58: #{tpu_custom_call.1} parent=5 // pred_check_branch
        %320 = sbr.rel (%p317) target = $region60
      $region59: #{tpu_custom_call.1} parent=5 // pred_region
        %s321 = ssub.s32 %s19, 1
        %s322 = smul.u32 14, %s24
        %p323 = scmp.lt.s32.totalorder %s322, 27
        %s324 = scalar_select %p323, %s322, 27
        %s325 = smul.addr %s324, 8
        %s326 = scalar_lea.vmem %s0, %s325
        %p327 = pneg %p45
        %p328 = pneg %p42
        %p329 = pneg %p66
        %p330 = pneg %p63
        %p331 = pneg %p87
        %p332 = pneg %p84
        %p333 = pneg %p108
        %p334 = pneg %p105
        %p335 = pneg %p129
        %p336 = pneg %p126
        %p337 = pneg %p150
        %p338 = pneg %p147
        %p339 = pneg %p171
        %p340 = pneg %p168
        %p341 = pneg %p192
        %p342 = pneg %p189
        %p343 = pneg %p213
        %p344 = pneg %p210
        %p345 = pneg %p234
        %p346 = pneg %p231
        %p347 = pneg %p260
        %p348 = pneg %p257
        %s349 = sand.u32 %s247, 1
        %s350 = scalar_lea.sflag [#allocation3], %s349
        %s351 = sand.u32 %s247, 1
        %s352 = smul.addr %s351, 56
        %s353 = scalar_lea.vmem [#allocation2], %s352
        %s354 = smul.u32 14, %s24
        %p355 = scmp.lt.s32.totalorder %s354, 27
        %s356 = scalar_select %p355, %s354, 27
        %s357 = smul.addr %s356, 8
        %s358 = scalar_lea.vmem %s0, %s357
        %s359 = smul.u32 14, %s24
        %s360 = smul.u32 7, %s24
        %s361 = ssub.s32 8, %s360
        %p362 = scmp.lt.s32.totalorder %s361, 7
        %s363 = scalar_select %p362, %s361, 7
        %s364 = smul.u32 128, %s363
        %v366 = vld [vmem:[%s358] ss:$2 sm:$0xff]
        %s367 = scalar_lea.vmem %s358, 16
        %v368 = vld [vmem:[%s367] ss:$2 sm:$0xff]
        %s369 = scalar_lea.vmem %s358, 32
        %v370 = vld [vmem:[%s369] ss:$2 sm:$0xff]
        %s371 = scalar_lea.vmem %s358, 48
        %v372 = vld [vmem:[%s371] ss:$2 sm:$0xff]
        %s373 = scalar_lea.vmem %s358, 64
        %v374 = vld [vmem:[%s373] ss:$2 sm:$0xff]
        %s375 = scalar_lea.vmem %s358, 80
        %v376 = vld [vmem:[%s375] ss:$2 sm:$0xff]
        %s377 = scalar_lea.vmem %s358, 96
        %v378 = vld [vmem:[%s377] ss:$2 sm:$0xff]
        %v379 = vld [vmem:[%s1] sm:$0x7]
        %v380 = vld [vmem:[%s2] sm:$0x1]
        %v382 = vlaneseq
        %v383 = vshrl.u32 %v382, 7
        %v384 = vsub.s32 0, %v383
        %v385 = vrot.slane %v380, %v384
        %vm387 = vcmask 23552
        %v389 = vsel %vm387, %v366, 0
        %v392 = vsel %vm387, %v368, 0
        %v395 = vsel %vm387, %v370, 0
        %v398 = vsel %vm387, %v372, 0
        %v401 = vsel %vm387, %v374, 0
        %v404 = vsel %vm387, %v376, 0
        %v407 = vsel %vm387, %v378, 0
        %vm409 = vcmask 1042432
        %v411 = vsel %vm409, %v379, 0
        %413 = vmatprep.subr.mxu0 0.0
        %414 = vmatpush1.msra.mxu0 %v411
        %415 = vmatprep.subr.mxu0 0.0
        %416 = vmatpush1.msra.mxu0 0.0
        %417 = vmatprep.subr.mxu0 0.0
        %418 = vmatpush1.msra.mxu0 0.0
        %419 = vmatprep.subr.mxu0 0.0
        %420 = vmatpush1.msra.mxu0 0.0
        %421 = vmatprep.subr.mxu0 0.0
        %422 = vmatpush1.msra.mxu0 0.0
        %423 = vmatprep.subr.mxu0 0.0
        %424 = vmatpush1.msra.mxu0 0.0
        %425 = vmatprep.subr.mxu0 0.0
        %426 = vmatpush1.msra.mxu0 0.0
        %427 = vmatprep.subr.mxu0 0.0
        %428 = vmatpush1.msra.mxu0 0.0
        %429 = vmatprep.subr.mxu0 0.0
        %430 = vmatpush1.msra.mxu0 0.0
        %431 = vmatprep.subr.mxu0 0.0
        %432 = vmatpush1.msra.mxu0 0.0
        %433 = vmatprep.subr.mxu0 0.0
        %434 = vmatpush1.msra.mxu0 0.0
        %435 = vmatprep.subr.mxu0 0.0
        %436 = vmatpush1.msra.mxu0 0.0
        %437 = vmatprep.subr.mxu0 0.0
        %438 = vmatpush1.msra.mxu0 0.0
        %439 = vmatprep.subr.mxu0 0.0
        %440 = vmatpush1.msra.mxu0 0.0
        %441 = vmatprep.subr.mxu0 0.0
        %442 = vmatpush1.msra.mxu0 0.0
        %443 = vmatprep.subr.mxu0 0.0
        %444 = vmatpush1.msra.mxu0 0.0
        %445 = vmatprep.subr.mxu0 0.0
        %446 = vmatpush1.msra.mxu0 0.0
        %447 = vmatprep.subr.mxu0 0.0
        %448 = vmatpush1.msra.mxu0 0.0
        %449 = vmatprep.subr.mxu0 0.0
        %450 = vmatpush1.msra.mxu0 0.0
        %451 = vmatprep.subr.mxu0 0.0
        %452 = vmatpush1.msra.mxu0 0.0
        %453 = vmatprep.subr.mxu0 0.0
        %454 = vmatpush1.msra.mxu0 0.0
        %455 = vmatprep.subr.mxu0 0.0
        %456 = vmatpush1.msra.mxu0 0.0
        %457 = vmatprep.subr.mxu0 0.0
        %458 = vmatpush1.msra.mxu0 0.0
        %459 = vmatprep.subr.mxu0 0.0
        %460 = vmatpush1.msra.mxu0 0.0
        %461 = vmatprep.subr.mxu0 0.0
        %462 = vmatpush1.msra.mxu0 0.0
        %463 = vmatprep.subr.mxu0 0.0
        %464 = vmatpush1.msra.mxu0 0.0
        %465 = vmatprep.subr.mxu0 0.0
        %466 = vmatpush1.msra.mxu0 0.0
        %467 = vmatprep.subr.mxu0 0.0
        %468 = vmatpush1.msra.mxu0 0.0
        %469 = vmatprep.subr.mxu0 0.0
        %470 = vmatpush1.msra.mxu0 0.0
        %471 = vmatprep.subr.mxu0 0.0
        %472 = vmatpush1.msra.mxu0 0.0
        %473 = vmatprep.subr.mxu0 0.0
        %474 = vmatpush1.msra.mxu0 0.0
        %475 = vmatprep.subr.mxu0 0.0
        %476 = vmatpush1.msra.mxu0 0.0
        %477 = vmatprep.mubr.f32.mxu0 0.0
        %478 = vmatmul.mubr.f32.gmra.mrb[0].mxu0 %v389
        %v479 = vpop.f32.mrb[0].mxu0
        %v480 = vadd.f32 %v385, %v479
        %v481 = vpop.f32.mrb[0].mxu0
        %482 = vmatprep.mubr.f32.mxu0 0.0
        %483 = vmatmul.mubr.f32.gmra.mrb[0].mxu0 %v392
        %v484 = vpop.f32.mrb[0].mxu0
        %v485 = vadd.f32 %v385, %v484
        %v486 = vpop.f32.mrb[0].mxu0
        %487 = vmatprep.mubr.f32.mxu0 0.0
        %488 = vmatmul.mubr.f32.gmra.mrb[0].mxu0 %v395
        %v489 = vpop.f32.mrb[0].mxu0
        %v490 = vadd.f32 %v385, %v489
        %v491 = vpop.f32.mrb[0].mxu0
        %492 = vmatprep.mubr.f32.mxu0 0.0
        %493 = vmatmul.mubr.f32.gmra.mrb[0].mxu0 %v398
        %v494 = vpop.f32.mrb[0].mxu0
        %v495 = vadd.f32 %v385, %v494
        %v496 = vpop.f32.mrb[0].mxu0
        %497 = vmatprep.mubr.f32.mxu0 0.0
        %498 = vmatmul.mubr.f32.gmra.mrb[0].mxu0 %v401
        %v499 = vpop.f32.mrb[0].mxu0
        %v500 = vadd.f32 %v385, %v499
        %v501 = vpop.f32.mrb[0].mxu0
        %502 = vmatprep.mubr.f32.mxu0 0.0
        %503 = vmatmul.mubr.f32.gmra.mrb[0].mxu0 %v404
        %v504 = vpop.f32.mrb[0].mxu0
        %v505 = vadd.f32 %v385, %v504
        %v506 = vpop.f32.mrb[0].mxu0
        %507 = vmatprep.mubr.f32.mxu0 0.0
        %508 = vmatmul.mubr.f32.gmra.mrb[0].mxu0 %v407
        %v509 = vpop.f32.mrb[0].mxu0
        %v510 = vadd.f32 %v385, %v509
        %v511 = vpop.f32.mrb[0].mxu0
        %512 = vdwg.mxu0
        %v513 = vand.u32 2147483647, %v480
        %vm514 = vcmp.le.f32.partialorder %v513, 0.7853982
        %vm515 = vcmp.lt.s32.totalorder %v480, 0
        %v516 = vand.u32 %v480, 2139095040
        %v517 = vshrl.u32 %v516, 23
        %v518 = vsub.s32 %v517, 127
        %v519 = vand.u32 2147483647, %v480
        %v520 = vand.u32 %v519, 8388607
        %v521 = vor.u32 %v520, 8388608
        %v522 = vsub.s32 0, %v521
        %v523 = vadd.s32 %v518, 1
        %vm524 = vcmp.gt.s32.totalorder %v523, 0
        %v525 = vsel %vm524, %v523, 0
        %v526 = vshrl.u32 %v525, 5
        %v527 = vand.u32 %v525, 31
        %v528 = vsub.s32 32, %v527
        %v529 = vshrl.u32 683565275, %v528
        %v530 = vshll.u32 683565275, %v527
        %v531 = vshrl.u32 2475754826, %v528
        %v532 = vor.u32 %v530, %v531
        %v533 = vshll.u32 2475754826, %v527
        %v534 = vshrl.u32 2131351028, %v528
        %v535 = vor.u32 %v533, %v534
        %v536 = vshll.u32 2131351028, %v527
        %v537 = vshrl.u32 2102212464, %v528
        %v538 = vor.u32 %v536, %v537
        %v539 = vshll.u32 2102212464, %v527
        %v540 = vshrl.u32 920167782, %v528
        %v541 = vor.u32 %v539, %v540
        %v542 = vshll.u32 920167782, %v527
        %v543 = vshrl.u32 1326507024, %v528
        %v544 = vor.u32 %v542, %v543
        %vm545 = vcmp.lt.s32.totalorder %v526, 1
        %vm546 = vcmp.lt.s32.totalorder %v526, 2
        %vm547 = vcmp.lt.s32.totalorder %v526, 3
        %vm548 = vcmp.lt.s32.totalorder %v526, 4
        %v549 = vsel %vm545, %v529, %v532
        %v550 = vsel %vm548, %v538, 2102212464
        %v551 = vsel %vm547, %v535, %v550
        %v552 = vsel %vm546, %v549, %v551
        %v553 = vsel %vm545, %v532, %v535
        %v554 = vsel %vm548, %v541, 920167782
        %v555 = vsel %vm547, %v538, %v554
        %v556 = vsel %vm546, %v553, %v555
        %v557 = vsel %vm545, %v535, %v538
        %v558 = vsel %vm548, %v544, 1326507024
        %v559 = vsel %vm547, %v541, %v558
        %v560 = vsel %vm546, %v557, %v559
        %v561 = vshll.u32 %v521, 8
        %v562 = vmul.u32.u64.compose %v561, %v560
        %v563 = vextract.low.u32 %v562
        %v564 = vextract.high.u32 %v562
        %v565 = vmul.u32.u64.compose %v561, %v556
        %v566 = vextract.low.u32 %v565
        %v567 = vextract.high.u32 %v565
        %v568 = vmul.u32 %v561, %v552
        %v569 = vadd.s32 %v564, %v566
        %vm570 = vc.u32 %v564, %v566
        %v571 = vadd.s32 %v567, 1
        %v572 = vsel %vm570, %v571, %v567
        %v573 = vadd.s32 %v568, %v572
        %v574 = vadd.s32 %v573, 536870912
        %v575 = vshrl.u32 %v574, 30
        %v576 = vshll.u32 %v575, 30
        %v577 = vsub.s32 %v573, %v576
        %vm578 = vcmp.lt.s32.totalorder %v577, 0
        %v579 = vsub.s32 0, %v577
        %v580 = vsel %vm578, %v579, %v577
        %v581 = vclz %v580
        %v582 = vsub.s32 %v581, 2
        %vm583 = vcmp.gt.s32.totalorder 0, %v582
        %v584 = vsel %vm583, 0, %v582
        %v585 = vsub.s32 32, %v584
        %v586 = vshll.u32 %v577, %v584
        %v587 = vshrl.u32 %v569, %v585
        %v588 = vor.u32 %v586, %v587
        %v589 = vsub.s32 4294967266, %v584
        %v590 = vadd.s32 %v589, 127
        %v591 = vshll.u32 %v590, 23
        %v592 = vor.u32 4788187, %v591
        %v593 = vand.u32 2147483647, %v592
        %v595 = vcvt.s32.f32 %v588
        %v596 = vmul.f32 %v595, %v593
        %v597 = vxor.u32 %v596, 2147483648
        %v598 = vsel %vm515, %v597, %v596
        %v599 = vsub.s32 4, %v575
        %v600 = vsel %vm515, %v599, %v575
        %v601 = vsel %vm514, %v480, %v598
        %v602 = vsel %vm514, 0, %v600
        %v603 = vcosq.f32.pop %v601
        %v604 = vsinq.f32.pop %v601
        %vm605 = vweird.f32 %v480
        %v606 = vadd.s32 %v602, 3
        %v607 = vand.u32 %v606, 3
        %vm608 = vcmp.lt.s32.totalorder %v607, 2
        %vm609 = vcmp.eq.s32.totalorder %v607, 0
        %v610 = vxor.u32 %v604, 2147483648
        %v611 = vsel %vm609, %v603, %v610
        %vm612 = vcmp.eq.s32.totalorder %v607, 2
        %v613 = vxor.u32 %v603, 2147483648
        %v614 = vsel %vm612, %v613, %v604
        %v615 = vsel %vm608, %v611, %v614
        %v616 = vsel %vm605, nan, %v615
        %v617 = vand.u32 2147483647, %v485
        %vm618 = vcmp.le.f32.partialorder %v617, 0.7853982
        %vm619 = vcmp.lt.s32.totalorder %v485, 0
        %v620 = vand.u32 %v485, 2139095040
        %v621 = vshrl.u32 %v620, 23
        %v622 = vsub.s32 %v621, 127
        %v623 = vand.u32 2147483647, %v485
        %v624 = vand.u32 %v623, 8388607
        %v625 = vor.u32 %v624, 8388608
        %v626 = vsub.s32 0, %v625
        %v627 = vadd.s32 %v622, 1
        %vm628 = vcmp.gt.s32.totalorder %v627, 0
        %v629 = vsel %vm628, %v627, 0
        %v630 = vshrl.u32 %v629, 5
        %v631 = vand.u32 %v629, 31
        %v632 = vsub.s32 32, %v631
        %v633 = vshrl.u32 683565275, %v632
        %v634 = vshll.u32 683565275, %v631
        %v635 = vshrl.u32 2475754826, %v632
        %v636 = vor.u32 %v634, %v635
        %v637 = vshll.u32 2475754826, %v631
        %v638 = vshrl.u32 2131351028, %v632
        %v639 = vor.u32 %v637, %v638
        %v640 = vshll.u32 2131351028, %v631
        %v641 = vshrl.u32 2102212464, %v632
        %v642 = vor.u32 %v640, %v641
        %v643 = vshll.u32 2102212464, %v631
        %v644 = vshrl.u32 920167782, %v632
        %v645 = vor.u32 %v643, %v644
        %v646 = vshll.u32 920167782, %v631
        %v647 = vshrl.u32 1326507024, %v632
        %v648 = vor.u32 %v646, %v647
        %vm649 = vcmp.lt.s32.totalorder %v630, 1
        %vm650 = vcmp.lt.s32.totalorder %v630, 2
        %vm651 = vcmp.lt.s32.totalorder %v630, 3
        %vm652 = vcmp.lt.s32.totalorder %v630, 4
        %v653 = vsel %vm649, %v633, %v636
        %v654 = vsel %vm652, %v642, 2102212464
        %v655 = vsel %vm651, %v639, %v654
        %v656 = vsel %vm650, %v653, %v655
        %v657 = vsel %vm649, %v636, %v639
        %v658 = vsel %vm652, %v645, 920167782
        %v659 = vsel %vm651, %v642, %v658
        %v660 = vsel %vm650, %v657, %v659
        %v661 = vsel %vm649, %v639, %v642
        %v662 = vsel %vm652, %v648, 1326507024
        %v663 = vsel %vm651, %v645, %v662
        %v664 = vsel %vm650, %v661, %v663
        %v665 = vshll.u32 %v625, 8
        %v666 = vmul.u32.u64.compose %v665, %v664
        %v667 = vextract.low.u32 %v666
        %v668 = vextract.high.u32 %v666
        %v669 = vmul.u32.u64.compose %v665, %v660
        %v670 = vextract.low.u32 %v669
        %v671 = vextract.high.u32 %v669
        %v672 = vmul.u32 %v665, %v656
        %v673 = vadd.s32 %v668, %v670
        %vm674 = vc.u32 %v668, %v670
        %v675 = vadd.s32 %v671, 1
        %v676 = vsel %vm674, %v675, %v671
        %v677 = vadd.s32 %v672, %v676
        %v678 = vadd.s32 %v677, 536870912
        %v679 = vshrl.u32 %v678, 30
        %v680 = vshll.u32 %v679, 30
        %v681 = vsub.s32 %v677, %v680
        %vm682 = vcmp.lt.s32.totalorder %v681, 0
        %v683 = vsub.s32 0, %v681
        %v684 = vsel %vm682, %v683, %v681
        %v685 = vclz %v684
        %v686 = vsub.s32 %v685, 2
        %vm687 = vcmp.gt.s32.totalorder 0, %v686
        %v688 = vsel %vm687, 0, %v686
        %v689 = vsub.s32 32, %v688
        %v690 = vshll.u32 %v681, %v688
        %v691 = vshrl.u32 %v673, %v689
        %v692 = vor.u32 %v690, %v691
        %v693 = vsub.s32 4294967266, %v688
        %v694 = vadd.s32 %v693, 127
        %v695 = vshll.u32 %v694, 23
        %v696 = vor.u32 4788187, %v695
        %v697 = vand.u32 2147483647, %v696
        %v699 = vcvt.s32.f32 %v692
        %v700 = vmul.f32 %v699, %v697
        %v701 = vxor.u32 %v700, 2147483648
        %v702 = vsel %vm619, %v701, %v700
        %v703 = vsub.s32 4, %v679
        %v704 = vsel %vm619, %v703, %v679
        %v705 = vsel %vm618, %v485, %v702
        %v706 = vsel %vm618, 0, %v704
        %v707 = vcosq.f32.pop %v705
        %v708 = vsinq.f32.pop %v705
        %vm709 = vweird.f32 %v485
        %v710 = vadd.s32 %v706, 3
        %v711 = vand.u32 %v710, 3
        %vm712 = vcmp.lt.s32.totalorder %v711, 2
        %vm713 = vcmp.eq.s32.totalorder %v711, 0
        %v714 = vxor.u32 %v708, 2147483648
        %v715 = vsel %vm713, %v707, %v714
        %vm716 = vcmp.eq.s32.totalorder %v711, 2
        %v717 = vxor.u32 %v707, 2147483648
        %v718 = vsel %vm716, %v717, %v708
        %v719 = vsel %vm712, %v715, %v718
        %v720 = vsel %vm709, nan, %v719
        %v721 = vand.u32 2147483647, %v490
        %vm722 = vcmp.le.f32.partialorder %v721, 0.7853982
        %vm723 = vcmp.lt.s32.totalorder %v490, 0
        %v724 = vand.u32 %v490, 2139095040
        %v725 = vshrl.u32 %v724, 23
        %v726 = vsub.s32 %v725, 127
        %v727 = vand.u32 2147483647, %v490
        %v728 = vand.u32 %v727, 8388607
        %v729 = vor.u32 %v728, 8388608
        %v730 = vsub.s32 0, %v729
        %v731 = vadd.s32 %v726, 1
        %vm732 = vcmp.gt.s32.totalorder %v731, 0
        %v733 = vsel %vm732, %v731, 0
        %v734 = vshrl.u32 %v733, 5
        %v735 = vand.u32 %v733, 31
        %v736 = vsub.s32 32, %v735
        %v737 = vshrl.u32 683565275, %v736
        %v738 = vshll.u32 683565275, %v735
        %v739 = vshrl.u32 2475754826, %v736
        %v740 = vor.u32 %v738, %v739
        %v741 = vshll.u32 2475754826, %v735
        %v742 = vshrl.u32 2131351028, %v736
        %v743 = vor.u32 %v741, %v742
        %v744 = vshll.u32 2131351028, %v735
        %v745 = vshrl.u32 2102212464, %v736
        %v746 = vor.u32 %v744, %v745
        %v747 = vshll.u32 2102212464, %v735
        %v748 = vshrl.u32 920167782, %v736
        %v749 = vor.u32 %v747, %v748
        %v750 = vshll.u32 920167782, %v735
        %v751 = vshrl.u32 1326507024, %v736
        %v752 = vor.u32 %v750, %v751
        %vm753 = vcmp.lt.s32.totalorder %v734, 1
        %vm754 = vcmp.lt.s32.totalorder %v734, 2
        %vm755 = vcmp.lt.s32.totalorder %v734, 3
        %vm756 = vcmp.lt.s32.totalorder %v734, 4
        %v757 = vsel %vm753, %v737, %v740
        %v758 = vsel %vm756, %v746, 2102212464
        %v759 = vsel %vm755, %v743, %v758
        %v760 = vsel %vm754, %v757, %v759
        %v761 = vsel %vm753, %v740, %v743
        %v762 = vsel %vm756, %v749, 920167782
        %v763 = vsel %vm755, %v746, %v762
        %v764 = vsel %vm754, %v761, %v763
        %v765 = vsel %vm753, %v743, %v746
        %v766 = vsel %vm756, %v752, 1326507024
        %v767 = vsel %vm755, %v749, %v766
        %v768 = vsel %vm754, %v765, %v767
        %v769 = vshll.u32 %v729, 8
        %v770 = vmul.u32.u64.compose %v769, %v768
        %v771 = vextract.low.u32 %v770
        %v772 = vextract.high.u32 %v770
        %v773 = vmul.u32.u64.compose %v769, %v764
        %v774 = vextract.low.u32 %v773
        %v775 = vextract.high.u32 %v773
        %v776 = vmul.u32 %v769, %v760
        %v777 = vadd.s32 %v772, %v774
        %vm778 = vc.u32 %v772, %v774
        %v779 = vadd.s32 %v775, 1
        %v780 = vsel %vm778, %v779, %v775
        %v781 = vadd.s32 %v776, %v780
        %v782 = vadd.s32 %v781, 536870912
        %v783 = vshrl.u32 %v782, 30
        %v784 = vshll.u32 %v783, 30
        %v785 = vsub.s32 %v781, %v784
        %vm786 = vcmp.lt.s32.totalorder %v785, 0
        %v787 = vsub.s32 0, %v785
        %v788 = vsel %vm786, %v787, %v785
        %v789 = vclz %v788
        %v790 = vsub.s32 %v789, 2
        %vm791 = vcmp.gt.s32.totalorder 0, %v790
        %v792 = vsel %vm791, 0, %v790
        %v793 = vsub.s32 32, %v792
        %v794 = vshll.u32 %v785, %v792
        %v795 = vshrl.u32 %v777, %v793
        %v796 = vor.u32 %v794, %v795
        %v797 = vsub.s32 4294967266, %v792
        %v798 = vadd.s32 %v797, 127
        %v799 = vshll.u32 %v798, 23
        %v800 = vor.u32 4788187, %v799
        %v801 = vand.u32 2147483647, %v800
        %v803 = vcvt.s32.f32 %v796
        %v804 = vmul.f32 %v803, %v801
        %v805 = vxor.u32 %v804, 2147483648
        %v806 = vsel %vm723, %v805, %v804
        %v807 = vsub.s32 4, %v783
        %v808 = vsel %vm723, %v807, %v783
        %v809 = vsel %vm722, %v490, %v806
        %v810 = vsel %vm722, 0, %v808
        %v811 = vcosq.f32.pop %v809
        %v812 = vsinq.f32.pop %v809
        %vm813 = vweird.f32 %v490
        %v814 = vadd.s32 %v810, 3
        %v815 = vand.u32 %v814, 3
        %vm816 = vcmp.lt.s32.totalorder %v815, 2
        %vm817 = vcmp.eq.s32.totalorder %v815, 0
        %v818 = vxor.u32 %v812, 2147483648
        %v819 = vsel %vm817, %v811, %v818
        %vm820 = vcmp.eq.s32.totalorder %v815, 2
        %v821 = vxor.u32 %v811, 2147483648
        %v822 = vsel %vm820, %v821, %v812
        %v823 = vsel %vm816, %v819, %v822
        %v824 = vsel %vm813, nan, %v823
        %v825 = vand.u32 2147483647, %v495
        %vm826 = vcmp.le.f32.partialorder %v825, 0.7853982
        %vm827 = vcmp.lt.s32.totalorder %v495, 0
        %v828 = vand.u32 %v495, 2139095040
        %v829 = vshrl.u32 %v828, 23
        %v830 = vsub.s32 %v829, 127
        %v831 = vand.u32 2147483647, %v495
        %v832 = vand.u32 %v831, 8388607
        %v833 = vor.u32 %v832, 8388608
        %v834 = vsub.s32 0, %v833
        %v835 = vadd.s32 %v830, 1
        %vm836 = vcmp.gt.s32.totalorder %v835, 0
        %v837 = vsel %vm836, %v835, 0
        %v838 = vshrl.u32 %v837, 5
        %v839 = vand.u32 %v837, 31
        %v840 = vsub.s32 32, %v839
        %v841 = vshrl.u32 683565275, %v840
        %v842 = vshll.u32 683565275, %v839
        %v843 = vshrl.u32 2475754826, %v840
        %v844 = vor.u32 %v842, %v843
        %v845 = vshll.u32 2475754826, %v839
        %v846 = vshrl.u32 2131351028, %v840
        %v847 = vor.u32 %v845, %v846
        %v848 = vshll.u32 2131351028, %v839
        %v849 = vshrl.u32 2102212464, %v840
        %v850 = vor.u32 %v848, %v849
        %v851 = vshll.u32 2102212464, %v839
        %v852 = vshrl.u32 920167782, %v840
        %v853 = vor.u32 %v851, %v852
        %v854 = vshll.u32 920167782, %v839
        %v855 = vshrl.u32 1326507024, %v840
        %v856 = vor.u32 %v854, %v855
        %vm857 = vcmp.lt.s32.totalorder %v838, 1
        %vm858 = vcmp.lt.s32.totalorder %v838, 2
        %vm859 = vcmp.lt.s32.totalorder %v838, 3
        %vm860 = vcmp.lt.s32.totalorder %v838, 4
        %v861 = vsel %vm857, %v841, %v844
        %v862 = vsel %vm860, %v850, 2102212464
        %v863 = vsel %vm859, %v847, %v862
        %v864 = vsel %vm858, %v861, %v863
        %v865 = vsel %vm857, %v844, %v847
        %v866 = vsel %vm860, %v853, 920167782
        %v867 = vsel %vm859, %v850, %v866
        %v868 = vsel %vm858, %v865, %v867
        %v869 = vsel %vm857, %v847, %v850
        %v870 = vsel %vm860, %v856, 1326507024
        %v871 = vsel %vm859, %v853, %v870
        %v872 = vsel %vm858, %v869, %v871
        %v873 = vshll.u32 %v833, 8
        %v874 = vmul.u32.u64.compose %v873, %v872
        %v875 = vextract.low.u32 %v874
        %v876 = vextract.high.u32 %v874
        %v877 = vmul.u32.u64.compose %v873, %v868
        %v878 = vextract.low.u32 %v877
        %v879 = vextract.high.u32 %v877
        %v880 = vmul.u32 %v873, %v864
        %v881 = vadd.s32 %v876, %v878
        %vm882 = vc.u32 %v876, %v878
        %v883 = vadd.s32 %v879, 1
        %v884 = vsel %vm882, %v883, %v879
        %v885 = vadd.s32 %v880, %v884
        %v886 = vadd.s32 %v885, 536870912
        %v887 = vshrl.u32 %v886, 30
        %v888 = vshll.u32 %v887, 30
        %v889 = vsub.s32 %v885, %v888
        %vm890 = vcmp.lt.s32.totalorder %v889, 0
        %v891 = vsub.s32 0, %v889
        %v892 = vsel %vm890, %v891, %v889
        %v893 = vclz %v892
        %v894 = vsub.s32 %v893, 2
        %vm895 = vcmp.gt.s32.totalorder 0, %v894
        %v896 = vsel %vm895, 0, %v894
        %v897 = vsub.s32 32, %v896
        %v898 = vshll.u32 %v889, %v896
        %v899 = vshrl.u32 %v881, %v897
        %v900 = vor.u32 %v898, %v899
        %v901 = vsub.s32 4294967266, %v896
        %v902 = vadd.s32 %v901, 127
        %v903 = vshll.u32 %v902, 23
        %v904 = vor.u32 4788187, %v903
        %v905 = vand.u32 2147483647, %v904
        %v907 = vcvt.s32.f32 %v900
        %v908 = vmul.f32 %v907, %v905
        %v909 = vxor.u32 %v908, 2147483648
        %v910 = vsel %vm827, %v909, %v908
        %v911 = vsub.s32 4, %v887
        %v912 = vsel %vm827, %v911, %v887
        %v913 = vsel %vm826, %v495, %v910
        %v914 = vsel %vm826, 0, %v912
        %v915 = vcosq.f32.pop %v913
        %v916 = vsinq.f32.pop %v913
        %vm917 = vweird.f32 %v495
        %v918 = vadd.s32 %v914, 3
        %v919 = vand.u32 %v918, 3
        %vm920 = vcmp.lt.s32.totalorder %v919, 2
        %vm921 = vcmp.eq.s32.totalorder %v919, 0
        %v922 = vxor.u32 %v916, 2147483648
        %v923 = vsel %vm921, %v915, %v922
        %vm924 = vcmp.eq.s32.totalorder %v919, 2
        %v925 = vxor.u32 %v915, 2147483648
        %v926 = vsel %vm924, %v925, %v916
        %v927 = vsel %vm920, %v923, %v926
        %v928 = vsel %vm917, nan, %v927
        %v929 = vand.u32 2147483647, %v500
        %vm930 = vcmp.le.f32.partialorder %v929, 0.7853982
        %vm931 = vcmp.lt.s32.totalorder %v500, 0
        %v932 = vand.u32 %v500, 2139095040
        %v933 = vshrl.u32 %v932, 23
        %v934 = vsub.s32 %v933, 127
        %v935 = vand.u32 2147483647, %v500
        %v936 = vand.u32 %v935, 8388607
        %v937 = vor.u32 %v936, 8388608
        %v938 = vsub.s32 0, %v937
        %v939 = vadd.s32 %v934, 1
        %vm940 = vcmp.gt.s32.totalorder %v939, 0
        %v941 = vsel %vm940, %v939, 0
        %v942 = vshrl.u32 %v941, 5
        %v943 = vand.u32 %v941, 31
        %v944 = vsub.s32 32, %v943
        %v945 = vshrl.u32 683565275, %v944
        %v946 = vshll.u32 683565275, %v943
        %v947 = vshrl.u32 2475754826, %v944
        %v948 = vor.u32 %v946, %v947
        %v949 = vshll.u32 2475754826, %v943
        %v950 = vshrl.u32 2131351028, %v944
        %v951 = vor.u32 %v949, %v950
        %v952 = vshll.u32 2131351028, %v943
        %v953 = vshrl.u32 2102212464, %v944
        %v954 = vor.u32 %v952, %v953
        %v955 = vshll.u32 2102212464, %v943
        %v956 = vshrl.u32 920167782, %v944
        %v957 = vor.u32 %v955, %v956
        %v958 = vshll.u32 920167782, %v943
        %v959 = vshrl.u32 1326507024, %v944
        %v960 = vor.u32 %v958, %v959
        %vm961 = vcmp.lt.s32.totalorder %v942, 1
        %vm962 = vcmp.lt.s32.totalorder %v942, 2
        %vm963 = vcmp.lt.s32.totalorder %v942, 3
        %vm964 = vcmp.lt.s32.totalorder %v942, 4
        %v965 = vsel %vm961, %v945, %v948
        %v966 = vsel %vm964, %v954, 2102212464
        %v967 = vsel %vm963, %v951, %v966
        %v968 = vsel %vm962, %v965, %v967
        %v969 = vsel %vm961, %v948, %v951
        %v970 = vsel %vm964, %v957, 920167782
        %v971 = vsel %vm963, %v954, %v970
        %v972 = vsel %vm962, %v969, %v971
        %v973 = vsel %vm961, %v951, %v954
        %v974 = vsel %vm964, %v960, 1326507024
        %v975 = vsel %vm963, %v957, %v974
        %v976 = vsel %vm962, %v973, %v975
        %v977 = vshll.u32 %v937, 8
        %v978 = vmul.u32.u64.compose %v977, %v976
        %v979 = vextract.low.u32 %v978
        %v980 = vextract.high.u32 %v978
        %v981 = vmul.u32.u64.compose %v977, %v972
        %v982 = vextract.low.u32 %v981
        %v983 = vextract.high.u32 %v981
        %v984 = vmul.u32 %v977, %v968
        %v985 = vadd.s32 %v980, %v982
        %vm986 = vc.u32 %v980, %v982
        %v987 = vadd.s32 %v983, 1
        %v988 = vsel %vm986, %v987, %v983
        %v989 = vadd.s32 %v984, %v988
        %v990 = vadd.s32 %v989, 536870912
        %v991 = vshrl.u32 %v990, 30
        %v992 = vshll.u32 %v991, 30
        %v993 = vsub.s32 %v989, %v992
        %vm994 = vcmp.lt.s32.totalorder %v993, 0
        %v995 = vsub.s32 0, %v993
        %v996 = vsel %vm994, %v995, %v993
        %v997 = vclz %v996
        %v998 = vsub.s32 %v997, 2
        %vm999 = vcmp.gt.s32.totalorder 0, %v998
        %v1000 = vsel %vm999, 0, %v998
        %v1001 = vsub.s32 32, %v1000
        %v1002 = vshll.u32 %v993, %v1000
        %v1003 = vshrl.u32 %v985, %v1001
        %v1004 = vor.u32 %v1002, %v1003
        %v1005 = vsub.s32 4294967266, %v1000
        %v1006 = vadd.s32 %v1005, 127
        %v1007 = vshll.u32 %v1006, 23
        %v1008 = vor.u32 4788187, %v1007
        %v1009 = vand.u32 2147483647, %v1008
        %v1011 = vcvt.s32.f32 %v1004
        %v1012 = vmul.f32 %v1011, %v1009
        %v1013 = vxor.u32 %v1012, 2147483648
        %v1014 = vsel %vm931, %v1013, %v1012
        %v1015 = vsub.s32 4, %v991
        %v1016 = vsel %vm931, %v1015, %v991
        %v1017 = vsel %vm930, %v500, %v1014
        %v1018 = vsel %vm930, 0, %v1016
        %v1019 = vcosq.f32.pop %v1017
        %v1020 = vsinq.f32.pop %v1017
        %vm1021 = vweird.f32 %v500
        %v1022 = vadd.s32 %v1018, 3
        %v1023 = vand.u32 %v1022, 3
        %vm1024 = vcmp.lt.s32.totalorder %v1023, 2
        %vm1025 = vcmp.eq.s32.totalorder %v1023, 0
        %v1026 = vxor.u32 %v1020, 2147483648
        %v1027 = vsel %vm1025, %v1019, %v1026
        %vm1028 = vcmp.eq.s32.totalorder %v1023, 2
        %v1029 = vxor.u32 %v1019, 2147483648
        %v1030 = vsel %vm1028, %v1029, %v1020
        %v1031 = vsel %vm1024, %v1027, %v1030
        %v1032 = vsel %vm1021, nan, %v1031
        %v1033 = vand.u32 2147483647, %v505
        %vm1034 = vcmp.le.f32.partialorder %v1033, 0.7853982
        %vm1035 = vcmp.lt.s32.totalorder %v505, 0
        %v1036 = vand.u32 %v505, 2139095040
        %v1037 = vshrl.u32 %v1036, 23
        %v1038 = vsub.s32 %v1037, 127
        %v1039 = vand.u32 2147483647, %v505
        %v1040 = vand.u32 %v1039, 8388607
        %v1041 = vor.u32 %v1040, 8388608
        %v1042 = vsub.s32 0, %v1041
        %v1043 = vadd.s32 %v1038, 1
        %vm1044 = vcmp.gt.s32.totalorder %v1043, 0
        %v1045 = vsel %vm1044, %v1043, 0
        %v1046 = vshrl.u32 %v1045, 5
        %v1047 = vand.u32 %v1045, 31
        %v1048 = vsub.s32 32, %v1047
        %v1049 = vshrl.u32 683565275, %v1048
        %v1050 = vshll.u32 683565275, %v1047
        %v1051 = vshrl.u32 2475754826, %v1048
        %v1052 = vor.u32 %v1050, %v1051
        %v1053 = vshll.u32 2475754826, %v1047
        %v1054 = vshrl.u32 2131351028, %v1048
        %v1055 = vor.u32 %v1053, %v1054
        %v1056 = vshll.u32 2131351028, %v1047
        %v1057 = vshrl.u32 2102212464, %v1048
        %v1058 = vor.u32 %v1056, %v1057
        %v1059 = vshll.u32 2102212464, %v1047
        %v1060 = vshrl.u32 920167782, %v1048
        %v1061 = vor.u32 %v1059, %v1060
        %v1062 = vshll.u32 920167782, %v1047
        %v1063 = vshrl.u32 1326507024, %v1048
        %v1064 = vor.u32 %v1062, %v1063
        %vm1065 = vcmp.lt.s32.totalorder %v1046, 1
        %vm1066 = vcmp.lt.s32.totalorder %v1046, 2
        %vm1067 = vcmp.lt.s32.totalorder %v1046, 3
        %vm1068 = vcmp.lt.s32.totalorder %v1046, 4
        %v1069 = vsel %vm1065, %v1049, %v1052
        %v1070 = vsel %vm1068, %v1058, 2102212464
        %v1071 = vsel %vm1067, %v1055, %v1070
        %v1072 = vsel %vm1066, %v1069, %v1071
        %v1073 = vsel %vm1065, %v1052, %v1055
        %v1074 = vsel %vm1068, %v1061, 920167782
        %v1075 = vsel %vm1067, %v1058, %v1074
        %v1076 = vsel %vm1066, %v1073, %v1075
        %v1077 = vsel %vm1065, %v1055, %v1058
        %v1078 = vsel %vm1068, %v1064, 1326507024
        %v1079 = vsel %vm1067, %v1061, %v1078
        %v1080 = vsel %vm1066, %v1077, %v1079
        %v1081 = vshll.u32 %v1041, 8
        %v1082 = vmul.u32.u64.compose %v1081, %v1080
        %v1083 = vextract.low.u32 %v1082
        %v1084 = vextract.high.u32 %v1082
        %v1085 = vmul.u32.u64.compose %v1081, %v1076
        %v1086 = vextract.low.u32 %v1085
        %v1087 = vextract.high.u32 %v1085
        %v1088 = vmul.u32 %v1081, %v1072
        %v1089 = vadd.s32 %v1084, %v1086
        %vm1090 = vc.u32 %v1084, %v1086
        %v1091 = vadd.s32 %v1087, 1
        %v1092 = vsel %vm1090, %v1091, %v1087
        %v1093 = vadd.s32 %v1088, %v1092
        %v1094 = vadd.s32 %v1093, 536870912
        %v1095 = vshrl.u32 %v1094, 30
        %v1096 = vshll.u32 %v1095, 30
        %v1097 = vsub.s32 %v1093, %v1096
        %vm1098 = vcmp.lt.s32.totalorder %v1097, 0
        %v1099 = vsub.s32 0, %v1097
        %v1100 = vsel %vm1098, %v1099, %v1097
        %v1101 = vclz %v1100
        %v1102 = vsub.s32 %v1101, 2
        %vm1103 = vcmp.gt.s32.totalorder 0, %v1102
        %v1104 = vsel %vm1103, 0, %v1102
        %v1105 = vsub.s32 32, %v1104
        %v1106 = vshll.u32 %v1097, %v1104
        %v1107 = vshrl.u32 %v1089, %v1105
        %v1108 = vor.u32 %v1106, %v1107
        %v1109 = vsub.s32 4294967266, %v1104
        %v1110 = vadd.s32 %v1109, 127
        %v1111 = vshll.u32 %v1110, 23
        %v1112 = vor.u32 4788187, %v1111
        %v1113 = vand.u32 2147483647, %v1112
        %v1115 = vcvt.s32.f32 %v1108
        %v1116 = vmul.f32 %v1115, %v1113
        %v1117 = vxor.u32 %v1116, 2147483648
        %v1118 = vsel %vm1035, %v1117, %v1116
        %v1119 = vsub.s32 4, %v1095
        %v1120 = vsel %vm1035, %v1119, %v1095
        %v1121 = vsel %vm1034, %v505, %v1118
        %v1122 = vsel %vm1034, 0, %v1120
        %v1123 = vcosq.f32.pop %v1121
        %v1124 = vsinq.f32.pop %v1121
        %vm1125 = vweird.f32 %v505
        %v1126 = vadd.s32 %v1122, 3
        %v1127 = vand.u32 %v1126, 3
        %vm1128 = vcmp.lt.s32.totalorder %v1127, 2
        %vm1129 = vcmp.eq.s32.totalorder %v1127, 0
        %v1130 = vxor.u32 %v1124, 2147483648
        %v1131 = vsel %vm1129, %v1123, %v1130
        %vm1132 = vcmp.eq.s32.totalorder %v1127, 2
        %v1133 = vxor.u32 %v1123, 2147483648
        %v1134 = vsel %vm1132, %v1133, %v1124
        %v1135 = vsel %vm1128, %v1131, %v1134
        %v1136 = vsel %vm1125, nan, %v1135
        %v1137 = vand.u32 2147483647, %v510
        %vm1138 = vcmp.le.f32.partialorder %v1137, 0.7853982
        %vm1139 = vcmp.lt.s32.totalorder %v510, 0
        %v1140 = vand.u32 %v510, 2139095040
        %v1141 = vshrl.u32 %v1140, 23
        %v1142 = vsub.s32 %v1141, 127
        %v1143 = vand.u32 2147483647, %v510
        %v1144 = vand.u32 %v1143, 8388607
        %v1145 = vor.u32 %v1144, 8388608
        %v1146 = vsub.s32 0, %v1145
        %v1147 = vadd.s32 %v1142, 1
        %vm1148 = vcmp.gt.s32.totalorder %v1147, 0
        %v1149 = vsel %vm1148, %v1147, 0
        %v1150 = vshrl.u32 %v1149, 5
        %v1151 = vand.u32 %v1149, 31
        %v1152 = vsub.s32 32, %v1151
        %v1153 = vshrl.u32 683565275, %v1152
        %v1154 = vshll.u32 683565275, %v1151
        %v1155 = vshrl.u32 2475754826, %v1152
        %v1156 = vor.u32 %v1154, %v1155
        %v1157 = vshll.u32 2475754826, %v1151
        %v1158 = vshrl.u32 2131351028, %v1152
        %v1159 = vor.u32 %v1157, %v1158
        %v1160 = vshll.u32 2131351028, %v1151
        %v1161 = vshrl.u32 2102212464, %v1152
        %v1162 = vor.u32 %v1160, %v1161
        %v1163 = vshll.u32 2102212464, %v1151
        %v1164 = vshrl.u32 920167782, %v1152
        %v1165 = vor.u32 %v1163, %v1164
        %v1166 = vshll.u32 920167782, %v1151
        %v1167 = vshrl.u32 1326507024, %v1152
        %v1168 = vor.u32 %v1166, %v1167
        %vm1169 = vcmp.lt.s32.totalorder %v1150, 1
        %vm1170 = vcmp.lt.s32.totalorder %v1150, 2
        %vm1171 = vcmp.lt.s32.totalorder %v1150, 3
        %vm1172 = vcmp.lt.s32.totalorder %v1150, 4
        %v1173 = vsel %vm1169, %v1153, %v1156
        %v1174 = vsel %vm1172, %v1162, 2102212464
        %v1175 = vsel %vm1171, %v1159, %v1174
        %v1176 = vsel %vm1170, %v1173, %v1175
        %v1177 = vsel %vm1169, %v1156, %v1159
        %v1178 = vsel %vm1172, %v1165, 920167782
        %v1179 = vsel %vm1171, %v1162, %v1178
        %v1180 = vsel %vm1170, %v1177, %v1179
        %v1181 = vsel %vm1169, %v1159, %v1162
        %v1182 = vsel %vm1172, %v1168, 1326507024
        %v1183 = vsel %vm1171, %v1165, %v1182
        %v1184 = vsel %vm1170, %v1181, %v1183
        %v1185 = vshll.u32 %v1145, 8
        %v1186 = vmul.u32.u64.compose %v1185, %v1184
        %v1187 = vextract.low.u32 %v1186
        %v1188 = vextract.high.u32 %v1186
        %v1189 = vmul.u32.u64.compose %v1185, %v1180
        %v1190 = vextract.low.u32 %v1189
        %v1191 = vextract.high.u32 %v1189
        %v1192 = vmul.u32 %v1185, %v1176
        %v1193 = vadd.s32 %v1188, %v1190
        %vm1194 = vc.u32 %v1188, %v1190
        %v1195 = vadd.s32 %v1191, 1
        %v1196 = vsel %vm1194, %v1195, %v1191
        %v1197 = vadd.s32 %v1192, %v1196
        %v1198 = vadd.s32 %v1197, 536870912
        %v1199 = vshrl.u32 %v1198, 30
        %v1200 = vshll.u32 %v1199, 30
        %v1201 = vsub.s32 %v1197, %v1200
        %vm1202 = vcmp.lt.s32.totalorder %v1201, 0
        %v1203 = vsub.s32 0, %v1201
        %v1204 = vsel %vm1202, %v1203, %v1201
        %v1205 = vclz %v1204
        %v1206 = vsub.s32 %v1205, 2
        %vm1207 = vcmp.gt.s32.totalorder 0, %v1206
        %v1208 = vsel %vm1207, 0, %v1206
        %v1209 = vsub.s32 32, %v1208
        %v1210 = vshll.u32 %v1201, %v1208
        %v1211 = vshrl.u32 %v1193, %v1209
        %v1212 = vor.u32 %v1210, %v1211
        %v1213 = vsub.s32 4294967266, %v1208
        %v1214 = vadd.s32 %v1213, 127
        %v1215 = vshll.u32 %v1214, 23
        %v1216 = vor.u32 4788187, %v1215
        %v1217 = vand.u32 2147483647, %v1216
        %v1219 = vcvt.s32.f32 %v1212
        %v1220 = vmul.f32 %v1219, %v1217
        %v1221 = vxor.u32 %v1220, 2147483648
        %v1222 = vsel %vm1139, %v1221, %v1220
        %v1223 = vsub.s32 4, %v1199
        %v1224 = vsel %vm1139, %v1223, %v1199
        %v1225 = vsel %vm1138, %v510, %v1222
        %v1226 = vsel %vm1138, 0, %v1224
        %v1227 = vcosq.f32.pop %v1225
        %v1228 = vsinq.f32.pop %v1225
        %vm1229 = vweird.f32 %v510
        %v1230 = vadd.s32 %v1226, 3
        %v1231 = vand.u32 %v1230, 3
        %vm1232 = vcmp.lt.s32.totalorder %v1231, 2
        %vm1233 = vcmp.eq.s32.totalorder %v1231, 0
        %v1234 = vxor.u32 %v1228, 2147483648
        %v1235 = vsel %vm1233, %v1227, %v1234
        %vm1236 = vcmp.eq.s32.totalorder %v1231, 2
        %v1237 = vxor.u32 %v1227, 2147483648
        %v1238 = vsel %vm1236, %v1237, %v1228
        %v1239 = vsel %vm1232, %v1235, %v1238
        %v1240 = vsel %vm1229, nan, %v1239
        %v1241 = vpack.c.bf16 %v720, %v616
        %v1242 = vpack.c.bf16 %v928, %v824
        %v1243 = vpack.c.bf16 %v1136, %v1032
        %v1244 = vpack.c.bf16 %v1240, %v1240
        %v1245 = vld [vmem:[%s3] sm:$0xf]
        %v1246 = vld [vmem:[%s3 + $0x4] sm:$0xf]
        %v1247 = vld [vmem:[%s3 + $0x8] sm:$0xf]
        %v1248 = vpack.c.bf16 %v368, %v366
        %v1249 = vpack.c.bf16 %v372, %v370
        %v1250 = vpack.c.bf16 %v376, %v374
        %v1251 = vpack.c.bf16 %v378, %v378
        %v1252 = vld [vmem:[%s4] sm:$0x3]
        %v1254 = vsel %vm387, %v1248, 0
        %v1257 = vsel %vm387, %v1249, 0
        %v1260 = vsel %vm387, %v1250, 0
        %v1263 = vsel %vm387, %v1251, 0
        %vm1265 = vcmask 1040384
        %vm1266 = vcmask 1041408
        %v1267 = vsel %vm1265, 4294967295, 65535
        %v1268 = vsel %vm1266, %v1267, 0
        %v1270 = vand.u32 %v1252, %v1268
        %1272 = vmatprep.subr.bf16.mxu0 0
        %1273 = vmatpush1.bf16.msra.mxu0 %v1270
        %1274 = vmatprep.subr.bf16.mxu0 0
        %1275 = vmatpush1.bf16.msra.mxu0 0
        %1276 = vmatprep.subr.bf16.mxu0 0
        %1277 = vmatpush1.bf16.msra.mxu0 0
        %1278 = vmatprep.subr.bf16.mxu0 0
        %1279 = vmatpush1.bf16.msra.mxu0 0
        %1280 = vmatprep.subr.bf16.mxu0 0
        %1281 = vmatpush1.bf16.msra.mxu0 0
        %1282 = vmatprep.subr.bf16.mxu0 0
        %1283 = vmatpush1.bf16.msra.mxu0 0
        %1284 = vmatprep.subr.bf16.mxu0 0
        %1285 = vmatpush1.bf16.msra.mxu0 0
        %1286 = vmatprep.subr.bf16.mxu0 0
        %1287 = vmatpush1.bf16.msra.mxu0 0
        %1288 = vmatprep.subr.bf16.mxu0 0
        %1289 = vmatpush1.bf16.msra.mxu0 0
        %1290 = vmatprep.subr.bf16.mxu0 0
        %1291 = vmatpush1.bf16.msra.mxu0 0
        %1292 = vmatprep.subr.bf16.mxu0 0
        %1293 = vmatpush1.bf16.msra.mxu0 0
        %1294 = vmatprep.subr.bf16.mxu0 0
        %1295 = vmatpush1.bf16.msra.mxu0 0
        %1296 = vmatprep.subr.bf16.mxu0 0
        %1297 = vmatpush1.bf16.msra.mxu0 0
        %1298 = vmatprep.subr.bf16.mxu0 0
        %1299 = vmatpush1.bf16.msra.mxu0 0
        %1300 = vmatprep.subr.bf16.mxu0 0
        %1301 = vmatpush1.bf16.msra.mxu0 0
        %1302 = vmatprep.subr.bf16.mxu0 0
        %1303 = vmatpush1.bf16.msra.mxu0 0
        %1304 = vmatprep.mubr.bf16.mxu0 0
        %1305 = vmatmul.mubr.bf16.gmra.mrb[0].mxu0 %v1254
        %v1306 = vpop.f32.mrb[0].mxu0
        %v1307 = vadd.f32 0.0, %v1306
        %v1308 = vpop.f32.mrb[0].mxu0
        %v1309 = vpop.f32.mrb[0].mxu0
        %v1310 = vadd.f32 0.0, %v1309
        %v1311 = vpop.f32.mrb[0].mxu0
        %1312 = vmatprep.mubr.bf16.mxu0 0
        %1313 = vmatmul.mubr.bf16.gmra.mrb[0].mxu0 %v1257
        %v1314 = vpop.f32.mrb[0].mxu0
        %v1315 = vadd.f32 0.0, %v1314
        %v1316 = vpop.f32.mrb[0].mxu0
        %v1317 = vpop.f32.mrb[0].mxu0
        %v1318 = vadd.f32 0.0, %v1317
        %v1319 = vpop.f32.mrb[0].mxu0
        %1320 = vmatprep.mubr.bf16.mxu0 0
        %1321 = vmatmul.mubr.bf16.gmra.mrb[0].mxu0 %v1260
        %v1322 = vpop.f32.mrb[0].mxu0
        %v1323 = vadd.f32 0.0, %v1322
        %v1324 = vpop.f32.mrb[0].mxu0
        %v1325 = vpop.f32.mrb[0].mxu0
        %v1326 = vadd.f32 0.0, %v1325
        %v1327 = vpop.f32.mrb[0].mxu0
        %1328 = vmatprep.mubr.bf16.mxu0 0
        %1329 = vmatmul.mubr.bf16.gmra.mrb[0].mxu0 %v1263
        %v1330 = vpop.f32.mrb[0].mxu0
        %v1331 = vadd.f32 0.0, %v1330
        %v1332 = vpop.f32.mrb[0].mxu0
        %v1333 = vpop.f32.mrb[0].mxu0
        %v1334 = vpop.f32.mrb[0].mxu0
        %1335 = vdwg.mxu0
        %v1339 = vunpack.c.l.b16 %v1245
        %v1340 = vunpack.c.l.b16 %v1246
        %v1341 = vunpack.c.l.b16 %v1247
        %v1342 = vpack.c.b16 %v1340, %v1339
        %v1343 = vpack.c.b16 %v1341, %v1341
        %vm1345 = vcmask 195584
        %v1347 = vsel %vm1345, %v1241, 0
        %v1350 = vsel %vm1345, %v1242, 0
        %v1353 = vsel %vm1345, %v1243, 0
        %v1356 = vsel %vm1345, %v1244, 0
        %vm1358 = vcmask 1043456
        %v1360 = vsel %vm1358, %v1343, 0
        %1362 = vmatprep.subr.bf16.mxu0 0
        %1363 = vmatpush1.bf16.msra.mxu0 %v1342
        %1364 = vmatprep.subr.bf16.mxu0 0
        %1365 = vmatpush1.bf16.msra.mxu0 %v1360
        %1366 = vmatprep.subr.bf16.mxu0 0
        %1367 = vmatpush1.bf16.msra.mxu0 0
        %1368 = vmatprep.subr.bf16.mxu0 0
        %1369 = vmatpush1.bf16.msra.mxu0 0
        %1370 = vmatprep.subr.bf16.mxu0 0
        %1371 = vmatpush1.bf16.msra.mxu0 0
        %1372 = vmatprep.subr.bf16.mxu0 0
        %1373 = vmatpush1.bf16.msra.mxu0 0
        %1374 = vmatprep.subr.bf16.mxu0 0
        %1375 = vmatpush1.bf16.msra.mxu0 0
        %1376 = vmatprep.subr.bf16.mxu0 0
        %1377 = vmatpush1.bf16.msra.mxu0 0
        %1378 = vmatprep.subr.bf16.mxu0 0
        %1379 = vmatpush1.bf16.msra.mxu0 0
        %1380 = vmatprep.subr.bf16.mxu0 0
        %1381 = vmatpush1.bf16.msra.mxu0 0
        %1382 = vmatprep.subr.bf16.mxu0 0
        %1383 = vmatpush1.bf16.msra.mxu0 0
        %1384 = vmatprep.subr.bf16.mxu0 0
        %1385 = vmatpush1.bf16.msra.mxu0 0
        %1386 = vmatprep.subr.bf16.mxu0 0
        %1387 = vmatpush1.bf16.msra.mxu0 0
        %1388 = vmatprep.subr.bf16.mxu0 0
        %1389 = vmatpush1.bf16.msra.mxu0 0
        %1390 = vmatprep.subr.bf16.mxu0 0
        %1391 = vmatpush1.bf16.msra.mxu0 0
        %1392 = vmatprep.subr.bf16.mxu0 0
        %1393 = vmatpush1.bf16.msra.mxu0 0
        %1394 = vmatprep.mubr.bf16.mxu0 0
        %1395 = vmatmul.mubr.bf16.gmra.mrb[0].mxu0 %v1347
        %v1396 = vpop.f32.mrb[0].mxu0
        %v1397 = vadd.f32 %v1307, %v1396
        %v1398 = vpop.f32.mrb[0].mxu0
        %v1399 = vpop.f32.mrb[0].mxu0
        %v1400 = vadd.f32 %v1310, %v1399
        %v1401 = vpop.f32.mrb[0].mxu0
        %1402 = vmatprep.mubr.bf16.mxu0 0
        %1403 = vmatmul.mubr.bf16.gmra.mrb[0].mxu0 %v1350
        %v1404 = vpop.f32.mrb[0].mxu0
        %v1405 = vadd.f32 %v1315, %v1404
        %v1406 = vpop.f32.mrb[0].mxu0
        %v1407 = vpop.f32.mrb[0].mxu0
        %v1408 = vadd.f32 %v1318, %v1407
        %v1409 = vpop.f32.mrb[0].mxu0
        %1410 = vmatprep.mubr.bf16.mxu0 0
        %1411 = vmatmul.mubr.bf16.gmra.mrb[0].mxu0 %v1353
        %v1412 = vpop.f32.mrb[0].mxu0
        %v1413 = vadd.f32 %v1323, %v1412
        %v1414 = vpop.f32.mrb[0].mxu0
        %v1415 = vpop.f32.mrb[0].mxu0
        %v1416 = vadd.f32 %v1326, %v1415
        %v1417 = vpop.f32.mrb[0].mxu0
        %1418 = vmatprep.mubr.bf16.mxu0 0
        %1419 = vmatmul.mubr.bf16.gmra.mrb[0].mxu0 %v1356
        %v1420 = vpop.f32.mrb[0].mxu0
        %v1421 = vadd.f32 %v1331, %v1420
        %v1422 = vpop.f32.mrb[0].mxu0
        %v1423 = vpop.f32.mrb[0].mxu0
        %v1424 = vpop.f32.mrb[0].mxu0
        %1425 = vdwg.mxu0
        %v1426 = vld [vmem:[%s5] sm:$0x1]
        %v1428 = vlaneseq
        %v1429 = vshrl.u32 %v1428, 7
        %v1430 = vsub.s32 0, %v1429
        %v1431 = vrot.slane %v1426, %v1430
        %v1433 = vadd.f32 %v1397, %v1431
        %v1434 = vadd.f32 %v1400, %v1431
        %v1435 = vadd.f32 %v1405, %v1431
        %v1436 = vadd.f32 %v1408, %v1431
        %v1437 = vadd.f32 %v1413, %v1431
        %v1438 = vadd.f32 %v1416, %v1431
        %v1439 = vadd.f32 %v1421, %v1431
        %v1440 = vmax.f32 %v1433, 0.0
        %v1441 = vmax.f32 %v1434, 0.0
        %v1442 = vmax.f32 %v1435, 0.0
        %v1443 = vmax.f32 %v1436, 0.0
        %v1444 = vmax.f32 %v1437, 0.0
        %v1445 = vmax.f32 %v1438, 0.0
        %v1446 = vmax.f32 %v1439, 0.0
        %v1447 = vpack.c.bf16 %v1441, %v1440
        %v1448 = vpack.c.bf16 %v1443, %v1442
        %v1449 = vpack.c.bf16 %v1445, %v1444
        %v1450 = vpack.c.bf16 %v1446, %v1446
        %v1451 = vld [vmem:[%s6] sm:$0xf]
        %v1452 = vld [vmem:[%s6 + $0x4] sm:$0xf]
        %v1453 = vld [vmem:[%s7] sm:$0x1]
        %v1455 = vlaneseq
        %v1456 = vshrl.u32 %v1455, 7
        %v1457 = vsub.s32 0, %v1456
        %v1458 = vrot.slane %v1453, %v1457
        %v1462 = vunpack.c.l.b16 %v1451
        %v1463 = vunpack.c.l.b16 %v1452
        %v1464 = vpack.c.b16 %v1463, %v1462
        %vm1466 = vcmask 130048
        %v1468 = vsel %vm1466, %v1447, 0
        %v1471 = vsel %vm1466, %v1448, 0
        %v1474 = vsel %vm1466, %v1449, 0
        %v1477 = vsel %vm1466, %v1450, 0
        %1479 = vmatprep.subr.bf16.mxu0 0
        %1480 = vmatpush1.bf16.msra.mxu0 %v1464
        %1481 = vmatprep.subr.bf16.mxu0 0
        %1482 = vmatpush1.bf16.msra.mxu0 0
        %1483 = vmatprep.subr.bf16.mxu0 0
        %1484 = vmatpush1.bf16.msra.mxu0 0
        %1485 = vmatprep.subr.bf16.mxu0 0
        %1486 = vmatpush1.bf16.msra.mxu0 0
        %1487 = vmatprep.subr.bf16.mxu0 0
        %1488 = vmatpush1.bf16.msra.mxu0 0
        %1489 = vmatprep.subr.bf16.mxu0 0
        %1490 = vmatpush1.bf16.msra.mxu0 0
        %1491 = vmatprep.subr.bf16.mxu0 0
        %1492 = vmatpush1.bf16.msra.mxu0 0
        %1493 = vmatprep.subr.bf16.mxu0 0
        %1494 = vmatpush1.bf16.msra.mxu0 0
        %1495 = vmatprep.subr.bf16.mxu0 0
        %1496 = vmatpush1.bf16.msra.mxu0 0
        %1497 = vmatprep.subr.bf16.mxu0 0
        %1498 = vmatpush1.bf16.msra.mxu0 0
        %1499 = vmatprep.subr.bf16.mxu0 0
        %1500 = vmatpush1.bf16.msra.mxu0 0
        %1501 = vmatprep.subr.bf16.mxu0 0
        %1502 = vmatpush1.bf16.msra.mxu0 0
        %1503 = vmatprep.subr.bf16.mxu0 0
        %1504 = vmatpush1.bf16.msra.mxu0 0
        %1505 = vmatprep.subr.bf16.mxu0 0
        %1506 = vmatpush1.bf16.msra.mxu0 0
        %1507 = vmatprep.subr.bf16.mxu0 0
        %1508 = vmatpush1.bf16.msra.mxu0 0
        %1509 = vmatprep.subr.bf16.mxu0 0
        %1510 = vmatpush1.bf16.msra.mxu0 0
        %1511 = vmatprep.mubr.bf16.mxu0 0
        %1512 = vmatmul.mubr.bf16.gmra.mrb[0].mxu0 %v1468
        %v1513 = vpop.f32.mrb[0].mxu0
        %v1514 = vadd.f32 %v1458, %v1513
        %v1515 = vpop.f32.mrb[0].mxu0
        %v1516 = vpop.f32.mrb[0].mxu0
        %v1517 = vadd.f32 %v1458, %v1516
        %v1518 = vpop.f32.mrb[0].mxu0
        %1519 = vmatprep.mubr.bf16.mxu0 0
        %1520 = vmatmul.mubr.bf16.gmra.mrb[0].mxu0 %v1471
        %v1521 = vpop.f32.mrb[0].mxu0
        %v1522 = vadd.f32 %v1458, %v1521
        %v1523 = vpop.f32.mrb[0].mxu0
        %v1524 = vpop.f32.mrb[0].mxu0
        %v1525 = vadd.f32 %v1458, %v1524
        %v1526 = vpop.f32.mrb[0].mxu0
        %1527 = vmatprep.mubr.bf16.mxu0 0
        %1528 = vmatmul.mubr.bf16.gmra.mrb[0].mxu0 %v1474
        %v1529 = vpop.f32.mrb[0].mxu0
        %v1530 = vadd.f32 %v1458, %v1529
        %v1531 = vpop.f32.mrb[0].mxu0
        %v1532 = vpop.f32.mrb[0].mxu0
        %v1533 = vadd.f32 %v1458, %v1532
        %v1534 = vpop.f32.mrb[0].mxu0
        %1535 = vmatprep.mubr.bf16.mxu0 0
        %1536 = vmatmul.mubr.bf16.gmra.mrb[0].mxu0 %v1477
        %v1537 = vpop.f32.mrb[0].mxu0
        %v1538 = vadd.f32 %v1458, %v1537
        %v1539 = vpop.f32.mrb[0].mxu0
        %v1540 = vpop.f32.mrb[0].mxu0
        %v1541 = vpop.f32.mrb[0].mxu0
        %1542 = vdwg.mxu0
        %v1543 = vmax.f32 %v1514, 0.0
        %v1544 = vmax.f32 %v1517, 0.0
        %v1545 = vmax.f32 %v1522, 0.0
        %v1546 = vmax.f32 %v1525, 0.0
        %v1547 = vmax.f32 %v1530, 0.0
        %v1548 = vmax.f32 %v1533, 0.0
        %v1549 = vmax.f32 %v1538, 0.0
        %v1550 = vpack.c.bf16 %v1544, %v1543
        %v1551 = vpack.c.bf16 %v1546, %v1545
        %v1552 = vpack.c.bf16 %v1548, %v1547
        %v1553 = vpack.c.bf16 %v1549, %v1549
        %v1554 = vld [vmem:[%s8] sm:$0xf]
        %v1555 = vld [vmem:[%s8 + $0x4] sm:$0xf]
        %v1556 = vld [vmem:[%s8 + $0x8] sm:$0xf]
        %v1557 = vld [vmem:[%s8 + $0xc] sm:$0xf]
        %v1558 = vld [vmem:[%s9] sm:$0x1]
        %v1560 = vlaneseq
        %v1561 = vshrl.u32 %v1560, 7
        %v1562 = vsub.s32 0, %v1561
        %v1563 = vrot.slane %v1558, %v1562
        %v1569 = vunpack.c.l.b16 %v1554
        %v1570 = vunpack.c.l.b16 %v1555
        %v1571 = vunpack.c.l.b16 %v1556
        %v1572 = vunpack.c.l.b16 %v1557
        %v1573 = vpack.c.b16 %v1570, %v1569
        %v1574 = vpack.c.b16 %v1572, %v1571
        %vm1577 = vcmask 261120
        %v1579 = vsel %vm1577, %v1550, 0
        %v1582 = vsel %vm1577, %v1551, 0
        %v1585 = vsel %vm1577, %v1552, 0
        %v1588 = vsel %vm1577, %v1553, 0
        %1590 = vmatprep.subr.bf16.mxu0 0
        %1591 = vmatpush1.bf16.msra.mxu0 %v1573
        %1592 = vmatprep.subr.bf16.mxu0 0
        %1593 = vmatpush1.bf16.msra.mxu0 %v1574
        %1594 = vmatprep.subr.bf16.mxu0 0
        %1595 = vmatpush1.bf16.msra.mxu0 0
        %1596 = vmatprep.subr.bf16.mxu0 0
        %1597 = vmatpush1.bf16.msra.mxu0 0
        %1598 = vmatprep.subr.bf16.mxu0 0
        %1599 = vmatpush1.bf16.msra.mxu0 0
        %1600 = vmatprep.subr.bf16.mxu0 0
        %1601 = vmatpush1.bf16.msra.mxu0 0
        %1602 = vmatprep.subr.bf16.mxu0 0
        %1603 = vmatpush1.bf16.msra.mxu0 0
        %1604 = vmatprep.subr.bf16.mxu0 0
        %1605 = vmatpush1.bf16.msra.mxu0 0
        %1606 = vmatprep.subr.bf16.mxu0 0
        %1607 = vmatpush1.bf16.msra.mxu0 0
        %1608 = vmatprep.subr.bf16.mxu0 0
        %1609 = vmatpush1.bf16.msra.mxu0 0
        %1610 = vmatprep.subr.bf16.mxu0 0
        %1611 = vmatpush1.bf16.msra.mxu0 0
        %1612 = vmatprep.subr.bf16.mxu0 0
        %1613 = vmatpush1.bf16.msra.mxu0 0
        %1614 = vmatprep.subr.bf16.mxu0 0
        %1615 = vmatpush1.bf16.msra.mxu0 0
        %1616 = vmatprep.subr.bf16.mxu0 0
        %1617 = vmatpush1.bf16.msra.mxu0 0
        %1618 = vmatprep.subr.bf16.mxu0 0
        %1619 = vmatpush1.bf16.msra.mxu0 0
        %1620 = vmatprep.subr.bf16.mxu0 0
        %1621 = vmatpush1.bf16.msra.mxu0 0
        %1622 = vmatprep.mubr.bf16.mxu0 0
        %1623 = vmatmul.mubr.bf16.gmra.mrb[0].mxu0 %v1579
        %v1624 = vpop.f32.mrb[0].mxu0
        %v1625 = vadd.f32 %v1563, %v1624
        %v1626 = vpop.f32.mrb[0].mxu0
        %v1627 = vpop.f32.mrb[0].mxu0
        %v1628 = vadd.f32 %v1563, %v1627
        %v1629 = vpop.f32.mrb[0].mxu0
        %1630 = vmatprep.mubr.bf16.mxu0 0
        %1631 = vmatmul.mubr.bf16.gmra.mrb[0].mxu0 %v1582
        %v1632 = vpop.f32.mrb[0].mxu0
        %v1633 = vadd.f32 %v1563, %v1632
        %v1634 = vpop.f32.mrb[0].mxu0
        %v1635 = vpop.f32.mrb[0].mxu0
        %v1636 = vadd.f32 %v1563, %v1635
        %v1637 = vpop.f32.mrb[0].mxu0
        %1638 = vmatprep.mubr.bf16.mxu0 0
        %1639 = vmatmul.mubr.bf16.gmra.mrb[0].mxu0 %v1585
        %v1640 = vpop.f32.mrb[0].mxu0
        %v1641 = vadd.f32 %v1563, %v1640
        %v1642 = vpop.f32.mrb[0].mxu0
        %v1643 = vpop.f32.mrb[0].mxu0
        %v1644 = vadd.f32 %v1563, %v1643
        %v1645 = vpop.f32.mrb[0].mxu0
        %1646 = vmatprep.mubr.bf16.mxu0 0
        %1647 = vmatmul.mubr.bf16.gmra.mrb[0].mxu0 %v1588
        %v1648 = vpop.f32.mrb[0].mxu0
        %v1649 = vadd.f32 %v1563, %v1648
        %v1650 = vpop.f32.mrb[0].mxu0
        %v1651 = vpop.f32.mrb[0].mxu0
        %v1652 = vpop.f32.mrb[0].mxu0
        %1653 = vdwg.mxu0
        %s1654 = scalar_lea.vmem %s358, 1
        %v1655 = vld [vmem:[%s1654] ss:$2 sm:$0xff]
        %s1656 = scalar_lea.vmem %s358, 17
        %v1657 = vld [vmem:[%s1656] ss:$2 sm:$0xff]
        %s1658 = scalar_lea.vmem %s358, 33
        %v1659 = vld [vmem:[%s1658] ss:$2 sm:$0xff]
        %s1660 = scalar_lea.vmem %s358, 49
        %v1661 = vld [vmem:[%s1660] ss:$2 sm:$0xff]
        %s1662 = scalar_lea.vmem %s358, 65
        %v1663 = vld [vmem:[%s1662] ss:$2 sm:$0xff]
        %s1664 = scalar_lea.vmem %s358, 81
        %v1665 = vld [vmem:[%s1664] ss:$2 sm:$0xff]
        %s1666 = scalar_lea.vmem %s358, 97
        %v1667 = vld [vmem:[%s1666] ss:$2 sm:$0xff]
        %v1669 = vsel %vm387, %v1655, 0
        %v1672 = vsel %vm387, %v1657, 0
        %v1675 = vsel %vm387, %v1659, 0
        %v1678 = vsel %vm387, %v1661, 0
        %v1681 = vsel %vm387, %v1663, 0
        %v1684 = vsel %vm387, %v1665, 0
        %v1687 = vsel %vm387, %v1667, 0
        %1689 = vmatprep.subr.mxu0 0.0
        %1690 = vmatpush1.msra.mxu0 %v411
        %1691 = vmatprep.subr.mxu0 0.0
        %1692 = vmatpush1.msra.mxu0 0.0
        %1693 = vmatprep.subr.mxu0 0.0
        %1694 = vmatpush1.msra.mxu0 0.0
        %1695 = vmatprep.subr.mxu0 0.0
        %1696 = vmatpush1.msra.mxu0 0.0
        %1697 = vmatprep.subr.mxu0 0.0
        %1698 = vmatpush1.msra.mxu0 0.0
        %1699 = vmatprep.subr.mxu0 0.0
        %1700 = vmatpush1.msra.mxu0 0.0
        %1701 = vmatprep.subr.mxu0 0.0
        %1702 = vmatpush1.msra.mxu0 0.0
        %1703 = vmatprep.subr.mxu0 0.0
        %1704 = vmatpush1.msra.mxu0 0.0
        %1705 = vmatprep.subr.mxu0 0.0
        %1706 = vmatpush1.msra.mxu0 0.0
        %1707 = vmatprep.subr.mxu0 0.0
        %1708 = vmatpush1.msra.mxu0 0.0
        %1709 = vmatprep.subr.mxu0 0.0
        %1710 = vmatpush1.msra.mxu0 0.0
        %1711 = vmatprep.subr.mxu0 0.0
        %1712 = vmatpush1.msra.mxu0 0.0
        %1713 = vmatprep.subr.mxu0 0.0
        %1714 = vmatpush1.msra.mxu0 0.0
        %1715 = vmatprep.subr.mxu0 0.0
        %1716 = vmatpush1.msra.mxu0 0.0
        %1717 = vmatprep.subr.mxu0 0.0
        %1718 = vmatpush1.msra.mxu0 0.0
        %1719 = vmatprep.subr.mxu0 0.0
        %1720 = vmatpush1.msra.mxu0 0.0
        %1721 = vmatprep.subr.mxu0 0.0
        %1722 = vmatpush1.msra.mxu0 0.0
        %1723 = vmatprep.subr.mxu0 0.0
        %1724 = vmatpush1.msra.mxu0 0.0
        %1725 = vmatprep.subr.mxu0 0.0
        %1726 = vmatpush1.msra.mxu0 0.0
        %1727 = vmatprep.subr.mxu0 0.0
        %1728 = vmatpush1.msra.mxu0 0.0
        %1729 = vmatprep.subr.mxu0 0.0
        %1730 = vmatpush1.msra.mxu0 0.0
        %1731 = vmatprep.subr.mxu0 0.0
        %1732 = vmatpush1.msra.mxu0 0.0
        %1733 = vmatprep.subr.mxu0 0.0
        %1734 = vmatpush1.msra.mxu0 0.0
        %1735 = vmatprep.subr.mxu0 0.0
        %1736 = vmatpush1.msra.mxu0 0.0
        %1737 = vmatprep.subr.mxu0 0.0
        %1738 = vmatpush1.msra.mxu0 0.0
        %1739 = vmatprep.subr.mxu0 0.0
        %1740 = vmatpush1.msra.mxu0 0.0
        %1741 = vmatprep.subr.mxu0 0.0
        %1742 = vmatpush1.msra.mxu0 0.0
        %1743 = vmatprep.subr.mxu0 0.0
        %1744 = vmatpush1.msra.mxu0 0.0
        %1745 = vmatprep.subr.mxu0 0.0
        %1746 = vmatpush1.msra.mxu0 0.0
        %1747 = vmatprep.subr.mxu0 0.0
        %1748 = vmatpush1.msra.mxu0 0.0
        %1749 = vmatprep.subr.mxu0 0.0
        %1750 = vmatpush1.msra.mxu0 0.0
        %1751 = vmatprep.subr.mxu0 0.0
        %1752 = vmatpush1.msra.mxu0 0.0
        %1753 = vmatprep.mubr.f32.mxu0 0.0
        %1754 = vmatmul.mubr.f32.gmra.mrb[0].mxu0 %v1669
        %v1755 = vpop.f32.mrb[0].mxu0
        %v1756 = vadd.f32 %v385, %v1755
        %v1757 = vpop.f32.mrb[0].mxu0
        %1758 = vmatprep.mubr.f32.mxu0 0.0
        %1759 = vmatmul.mubr.f32.gmra.mrb[0].mxu0 %v1672
        %v1760 = vpop.f32.mrb[0].mxu0
        %v1761 = vadd.f32 %v385, %v1760
        %v1762 = vpop.f32.mrb[0].mxu0
        %1763 = vmatprep.mubr.f32.mxu0 0.0
        %1764 = vmatmul.mubr.f32.gmra.mrb[0].mxu0 %v1675
        %v1765 = vpop.f32.mrb[0].mxu0
        %v1766 = vadd.f32 %v385, %v1765
        %v1767 = vpop.f32.mrb[0].mxu0
        %1768 = vmatprep.mubr.f32.mxu0 0.0
        %1769 = vmatmul.mubr.f32.gmra.mrb[0].mxu0 %v1678
        %v1770 = vpop.f32.mrb[0].mxu0
        %v1771 = vadd.f32 %v385, %v1770
        %v1772 = vpop.f32.mrb[0].mxu0
        %1773 = vmatprep.mubr.f32.mxu0 0.0
        %1774 = vmatmul.mubr.f32.gmra.mrb[0].mxu0 %v1681
        %v1775 = vpop.f32.mrb[0].mxu0
        %v1776 = vadd.f32 %v385, %v1775
        %v1777 = vpop.f32.mrb[0].mxu0
        %1778 = vmatprep.mubr.f32.mxu0 0.0
        %1779 = vmatmul.mubr.f32.gmra.mrb[0].mxu0 %v1684
        %v1780 = vpop.f32.mrb[0].mxu0
        %v1781 = vadd.f32 %v385, %v1780
        %v1782 = vpop.f32.mrb[0].mxu0
        %1783 = vmatprep.mubr.f32.mxu0 0.0
        %1784 = vmatmul.mubr.f32.gmra.mrb[0].mxu0 %v1687
        %v1785 = vpop.f32.mrb[0].mxu0
        %v1786 = vadd.f32 %v385, %v1785
        %v1787 = vpop.f32.mrb[0].mxu0
        %1788 = vdwg.mxu0
        %v1789 = vand.u32 2147483647, %v1756
        %vm1790 = vcmp.le.f32.partialorder %v1789, 0.7853982
        %vm1791 = vcmp.lt.s32.totalorder %v1756, 0
        %v1792 = vand.u32 %v1756, 2139095040
        %v1793 = vshrl.u32 %v1792, 23
        %v1794 = vsub.s32 %v1793, 127
        %v1795 = vand.u32 2147483647, %v1756
        %v1796 = vand.u32 %v1795, 8388607
        %v1797 = vor.u32 %v1796, 8388608
        %v1798 = vsub.s32 0, %v1797
        %v1799 = vadd.s32 %v1794, 1
        %vm1800 = vcmp.gt.s32.totalorder %v1799, 0
        %v1801 = vsel %vm1800, %v1799, 0
        %v1802 = vshrl.u32 %v1801, 5
        %v1803 = vand.u32 %v1801, 31
        %v1804 = vsub.s32 32, %v1803
        %v1805 = vshrl.u32 683565275, %v1804
        %v1806 = vshll.u32 683565275, %v1803
        %v1807 = vshrl.u32 2475754826, %v1804
        %v1808 = vor.u32 %v1806, %v1807
        %v1809 = vshll.u32 2475754826, %v1803
        %v1810 = vshrl.u32 2131351028, %v1804
        %v1811 = vor.u32 %v1809, %v1810
        %v1812 = vshll.u32 2131351028, %v1803
        %v1813 = vshrl.u32 2102212464, %v1804
        %v1814 = vor.u32 %v1812, %v1813
        %v1815 = vshll.u32 2102212464, %v1803
        %v1816 = vshrl.u32 920167782, %v1804
        %v1817 = vor.u32 %v1815, %v1816
        %v1818 = vshll.u32 920167782, %v1803
        %v1819 = vshrl.u32 1326507024, %v1804
        %v1820 = vor.u32 %v1818, %v1819
        %vm1821 = vcmp.lt.s32.totalorder %v1802, 1
        %vm1822 = vcmp.lt.s32.totalorder %v1802, 2
        %vm1823 = vcmp.lt.s32.totalorder %v1802, 3
        %vm1824 = vcmp.lt.s32.totalorder %v1802, 4
        %v1825 = vsel %vm1821, %v1805, %v1808
        %v1826 = vsel %vm1824, %v1814, 2102212464
        %v1827 = vsel %vm1823, %v1811, %v1826
        %v1828 = vsel %vm1822, %v1825, %v1827
        %v1829 = vsel %vm1821, %v1808, %v1811
        %v1830 = vsel %vm1824, %v1817, 920167782
        %v1831 = vsel %vm1823, %v1814, %v1830
        %v1832 = vsel %vm1822, %v1829, %v1831
        %v1833 = vsel %vm1821, %v1811, %v1814
        %v1834 = vsel %vm1824, %v1820, 1326507024
        %v1835 = vsel %vm1823, %v1817, %v1834
        %v1836 = vsel %vm1822, %v1833, %v1835
        %v1837 = vshll.u32 %v1797, 8
        %v1838 = vmul.u32.u64.compose %v1837, %v1836
        %v1839 = vextract.low.u32 %v1838
        %v1840 = vextract.high.u32 %v1838
        %v1841 = vmul.u32.u64.compose %v1837, %v1832
        %v1842 = vextract.low.u32 %v1841
        %v1843 = vextract.high.u32 %v1841
        %v1844 = vmul.u32 %v1837, %v1828
        %v1845 = vadd.s32 %v1840, %v1842
        %vm1846 = vc.u32 %v1840, %v1842
        %v1847 = vadd.s32 %v1843, 1
        %v1848 = vsel %vm1846, %v1847, %v1843
        %v1849 = vadd.s32 %v1844, %v1848
        %v1850 = vadd.s32 %v1849, 536870912
        %v1851 = vshrl.u32 %v1850, 30
        %v1852 = vshll.u32 %v1851, 30
        %v1853 = vsub.s32 %v1849, %v1852
        %vm1854 = vcmp.lt.s32.totalorder %v1853, 0
        %v1855 = vsub.s32 0, %v1853
        %v1856 = vsel %vm1854, %v1855, %v1853
        %v1857 = vclz %v1856
        %v1858 = vsub.s32 %v1857, 2
        %vm1859 = vcmp.gt.s32.totalorder 0, %v1858
        %v1860 = vsel %vm1859, 0, %v1858
        %v1861 = vsub.s32 32, %v1860
        %v1862 = vshll.u32 %v1853, %v1860
        %v1863 = vshrl.u32 %v1845, %v1861
        %v1864 = vor.u32 %v1862, %v1863
        %v1865 = vsub.s32 4294967266, %v1860
        %v1866 = vadd.s32 %v1865, 127
        %v1867 = vshll.u32 %v1866, 23
        %v1868 = vor.u32 4788187, %v1867
        %v1869 = vand.u32 2147483647, %v1868
        %v1871 = vcvt.s32.f32 %v1864
        %v1872 = vmul.f32 %v1871, %v1869
        %v1873 = vxor.u32 %v1872, 2147483648
        %v1874 = vsel %vm1791, %v1873, %v1872
        %v1875 = vsub.s32 4, %v1851
        %v1876 = vsel %vm1791, %v1875, %v1851
        %v1877 = vsel %vm1790, %v1756, %v1874
        %v1878 = vsel %vm1790, 0, %v1876
        %v1879 = vcosq.f32.pop %v1877
        %v1880 = vsinq.f32.pop %v1877
        %vm1881 = vweird.f32 %v1756
        %v1882 = vadd.s32 %v1878, 3
        %v1883 = vand.u32 %v1882, 3
        %vm1884 = vcmp.lt.s32.totalorder %v1883, 2
        %vm1885 = vcmp.eq.s32.totalorder %v1883, 0
        %v1886 = vxor.u32 %v1880, 2147483648
        %v1887 = vsel %vm1885, %v1879, %v1886
        %vm1888 = vcmp.eq.s32.totalorder %v1883, 2
        %v1889 = vxor.u32 %v1879, 2147483648
        %v1890 = vsel %vm1888, %v1889, %v1880
        %v1891 = vsel %vm1884, %v1887, %v1890
        %v1892 = vsel %vm1881, nan, %v1891
        %v1893 = vand.u32 2147483647, %v1761
        %vm1894 = vcmp.le.f32.partialorder %v1893, 0.7853982
        %vm1895 = vcmp.lt.s32.totalorder %v1761, 0
        %v1896 = vand.u32 %v1761, 2139095040
        %v1897 = vshrl.u32 %v1896, 23
        %v1898 = vsub.s32 %v1897, 127
        %v1899 = vand.u32 2147483647, %v1761
        %v1900 = vand.u32 %v1899, 8388607
        %v1901 = vor.u32 %v1900, 8388608
        %v1902 = vsub.s32 0, %v1901
        %v1903 = vadd.s32 %v1898, 1
        %vm1904 = vcmp.gt.s32.totalorder %v1903, 0
        %v1905 = vsel %vm1904, %v1903, 0
        %v1906 = vshrl.u32 %v1905, 5
        %v1907 = vand.u32 %v1905, 31
        %v1908 = vsub.s32 32, %v1907
        %v1909 = vshrl.u32 683565275, %v1908
        %v1910 = vshll.u32 683565275, %v1907
        %v1911 = vshrl.u32 2475754826, %v1908
        %v1912 = vor.u32 %v1910, %v1911
        %v1913 = vshll.u32 2475754826, %v1907
        %v1914 = vshrl.u32 2131351028, %v1908
        %v1915 = vor.u32 %v1913, %v1914
        %v1916 = vshll.u32 2131351028, %v1907
        %v1917 = vshrl.u32 2102212464, %v1908
        %v1918 = vor.u32 %v1916, %v1917
        %v1919 = vshll.u32 2102212464, %v1907
        %v1920 = vshrl.u32 920167782, %v1908
        %v1921 = vor.u32 %v1919, %v1920
        %v1922 = vshll.u32 920167782, %v1907
        %v1923 = vshrl.u32 1326507024, %v1908
        %v1924 = vor.u32 %v1922, %v1923
        %vm1925 = vcmp.lt.s32.totalorder %v1906, 1
        %vm1926 = vcmp.lt.s32.totalorder %v1906, 2
        %vm1927 = vcmp.lt.s32.totalorder %v1906, 3
        %vm1928 = vcmp.lt.s32.totalorder %v1906, 4
        %v1929 = vsel %vm1925, %v1909, %v1912
        %v1930 = vsel %vm1928, %v1918, 2102212464
        %v1931 = vsel %vm1927, %v1915, %v1930
        %v1932 = vsel %vm1926, %v1929, %v1931
        %v1933 = vsel %vm1925, %v1912, %v1915
        %v1934 = vsel %vm1928, %v1921, 920167782
        %v1935 = vsel %vm1927, %v1918, %v1934
        %v1936 = vsel %vm1926, %v1933, %v1935
        %v1937 = vsel %vm1925, %v1915, %v1918
        %v1938 = vsel %vm1928, %v1924, 1326507024
        %v1939 = vsel %vm1927, %v1921, %v1938
        %v1940 = vsel %vm1926, %v1937, %v1939
        %v1941 = vshll.u32 %v1901, 8
        %v1942 = vmul.u32.u64.compose %v1941, %v1940
        %v1943 = vextract.low.u32 %v1942
        %v1944 = vextract.high.u32 %v1942
        %v1945 = vmul.u32.u64.compose %v1941, %v1936
        %v1946 = vextract.low.u32 %v1945
        %v1947 = vextract.high.u32 %v1945
        %v1948 = vmul.u32 %v1941, %v1932
        %v1949 = vadd.s32 %v1944, %v1946
        %vm1950 = vc.u32 %v1944, %v1946
        %v1951 = vadd.s32 %v1947, 1
        %v1952 = vsel %vm1950, %v1951, %v1947
        %v1953 = vadd.s32 %v1948, %v1952
        %v1954 = vadd.s32 %v1953, 536870912
        %v1955 = vshrl.u32 %v1954, 30
        %v1956 = vshll.u32 %v1955, 30
        %v1957 = vsub.s32 %v1953, %v1956
        %vm1958 = vcmp.lt.s32.totalorder %v1957, 0
        %v1959 = vsub.s32 0, %v1957
        %v1960 = vsel %vm1958, %v1959, %v1957
        %v1961 = vclz %v1960
        %v1962 = vsub.s32 %v1961, 2
        %vm1963 = vcmp.gt.s32.totalorder 0, %v1962
        %v1964 = vsel %vm1963, 0, %v1962
        %v1965 = vsub.s32 32, %v1964
        %v1966 = vshll.u32 %v1957, %v1964
        %v1967 = vshrl.u32 %v1949, %v1965
        %v1968 = vor.u32 %v1966, %v1967
        %v1969 = vsub.s32 4294967266, %v1964
        %v1970 = vadd.s32 %v1969, 127
        %v1971 = vshll.u32 %v1970, 23
        %v1972 = vor.u32 4788187, %v1971
        %v1973 = vand.u32 2147483647, %v1972
        %v1975 = vcvt.s32.f32 %v1968
        %v1976 = vmul.f32 %v1975, %v1973
        %v1977 = vxor.u32 %v1976, 2147483648
        %v1978 = vsel %vm1895, %v1977, %v1976
        %v1979 = vsub.s32 4, %v1955
        %v1980 = vsel %vm1895, %v1979, %v1955
        %v1981 = vsel %vm1894, %v1761, %v1978
        %v1982 = vsel %vm1894, 0, %v1980
        %v1983 = vcosq.f32.pop %v1981
        %v1984 = vsinq.f32.pop %v1981
        %vm1985 = vweird.f32 %v1761
        %v1986 = vadd.s32 %v1982, 3
        %v1987 = vand.u32 %v1986, 3
        %vm1988 = vcmp.lt.s32.totalorder %v1987, 2
        %vm1989 = vcmp.eq.s32.totalorder %v1987, 0
        %v1990 = vxor.u32 %v1984, 2147483648
        %v1991 = vsel %vm1989, %v1983, %v1990
        %vm1992 = vcmp.eq.s32.totalorder %v1987, 2
        %v1993 = vxor.u32 %v1983, 2147483648
        %v1994 = vsel %vm1992, %v1993, %v1984
        %v1995 = vsel %vm1988, %v1991, %v1994
        %v1996 = vsel %vm1985, nan, %v1995
        %v1997 = vand.u32 2147483647, %v1766
        %vm1998 = vcmp.le.f32.partialorder %v1997, 0.7853982
        %vm1999 = vcmp.lt.s32.totalorder %v1766, 0
        %v2000 = vand.u32 %v1766, 2139095040
        %v2001 = vshrl.u32 %v2000, 23
        %v2002 = vsub.s32 %v2001, 127
        %v2003 = vand.u32 2147483647, %v1766
        %v2004 = vand.u32 %v2003, 8388607
        %v2005 = vor.u32 %v2004, 8388608
        %v2006 = vsub.s32 0, %v2005
        %v2007 = vadd.s32 %v2002, 1
        %vm2008 = vcmp.gt.s32.totalorder %v2007, 0
        %v2009 = vsel %vm2008, %v2007, 0
        %v2010 = vshrl.u32 %v2009, 5
        %v2011 = vand.u32 %v2009, 31
        %v2012 = vsub.s32 32, %v2011
        %v2013 = vshrl.u32 683565275, %v2012
        %v2014 = vshll.u32 683565275, %v2011
        %v2015 = vshrl.u32 2475754826, %v2012
        %v2016 = vor.u32 %v2014, %v2015
        %v2017 = vshll.u32 2475754826, %v2011
        %v2018 = vshrl.u32 2131351028, %v2012
        %v2019 = vor.u32 %v2017, %v2018
        %v2020 = vshll.u32 2131351028, %v2011
        %v2021 = vshrl.u32 2102212464, %v2012
        %v2022 = vor.u32 %v2020, %v2021
        %v2023 = vshll.u32 2102212464, %v2011
        %v2024 = vshrl.u32 920167782, %v2012
        %v2025 = vor.u32 %v2023, %v2024
        %v2026 = vshll.u32 920167782, %v2011
        %v2027 = vshrl.u32 1326507024, %v2012
        %v2028 = vor.u32 %v2026, %v2027
        %vm2029 = vcmp.lt.s32.totalorder %v2010, 1
        %vm2030 = vcmp.lt.s32.totalorder %v2010, 2
        %vm2031 = vcmp.lt.s32.totalorder %v2010, 3
        %vm2032 = vcmp.lt.s32.totalorder %v2010, 4
        %v2033 = vsel %vm2029, %v2013, %v2016
        %v2034 = vsel %vm2032, %v2022, 2102212464
        %v2035 = vsel %vm2031, %v2019, %v2034
        %v2036 = vsel %vm2030, %v2033, %v2035
        %v2037 = vsel %vm2029, %v2016, %v2019
        %v2038 = vsel %vm2032, %v2025, 920167782
        %v2039 = vsel %vm2031, %v2022, %v2038
        %v2040 = vsel %vm2030, %v2037, %v2039
        %v2041 = vsel %vm2029, %v2019, %v2022
        %v2042 = vsel %vm2032, %v2028, 1326507024
        %v2043 = vsel %vm2031, %v2025, %v2042
        %v2044 = vsel %vm2030, %v2041, %v2043
        %v2045 = vshll.u32 %v2005, 8
        %v2046 = vmul.u32.u64.compose %v2045, %v2044
        %v2047 = vextract.low.u32 %v2046
        %v2048 = vextract.high.u32 %v2046
        %v2049 = vmul.u32.u64.compose %v2045, %v2040
        %v2050 = vextract.low.u32 %v2049
        %v2051 = vextract.high.u32 %v2049
        %v2052 = vmul.u32 %v2045, %v2036
        %v2053 = vadd.s32 %v2048, %v2050
        %vm2054 = vc.u32 %v2048, %v2050
        %v2055 = vadd.s32 %v2051, 1
        %v2056 = vsel %vm2054, %v2055, %v2051
        %v2057 = vadd.s32 %v2052, %v2056
        %v2058 = vadd.s32 %v2057, 536870912
        %v2059 = vshrl.u32 %v2058, 30
        %v2060 = vshll.u32 %v2059, 30
        %v2061 = vsub.s32 %v2057, %v2060
        %vm2062 = vcmp.lt.s32.totalorder %v2061, 0
        %v2063 = vsub.s32 0, %v2061
        %v2064 = vsel %vm2062, %v2063, %v2061
        %v2065 = vclz %v2064
        %v2066 = vsub.s32 %v2065, 2
        %vm2067 = vcmp.gt.s32.totalorder 0, %v2066
        %v2068 = vsel %vm2067, 0, %v2066
        %v2069 = vsub.s32 32, %v2068
        %v2070 = vshll.u32 %v2061, %v2068
        %v2071 = vshrl.u32 %v2053, %v2069
        %v2072 = vor.u32 %v2070, %v2071
        %v2073 = vsub.s32 4294967266, %v2068
        %v2074 = vadd.s32 %v2073, 127
        %v2075 = vshll.u32 %v2074, 23
        %v2076 = vor.u32 4788187, %v2075
        %v2077 = vand.u32 2147483647, %v2076
        %v2079 = vcvt.s32.f32 %v2072
        %v2080 = vmul.f32 %v2079, %v2077
        %v2081 = vxor.u32 %v2080, 2147483648
        %v2082 = vsel %vm1999, %v2081, %v2080
        %v2083 = vsub.s32 4, %v2059
        %v2084 = vsel %vm1999, %v2083, %v2059
        %v2085 = vsel %vm1998, %v1766, %v2082
        %v2086 = vsel %vm1998, 0, %v2084
        %v2087 = vcosq.f32.pop %v2085
        %v2088 = vsinq.f32.pop %v2085
        %vm2089 = vweird.f32 %v1766
        %v2090 = vadd.s32 %v2086, 3
        %v2091 = vand.u32 %v2090, 3
        %vm2092 = vcmp.lt.s32.totalorder %v2091, 2
        %vm2093 = vcmp.eq.s32.totalorder %v2091, 0
        %v2094 = vxor.u32 %v2088, 2147483648
        %v2095 = vsel %vm2093, %v2087, %v2094
        %vm2096 = vcmp.eq.s32.totalorder %v2091, 2
        %v2097 = vxor.u32 %v2087, 2147483648
        %v2098 = vsel %vm2096, %v2097, %v2088
        %v2099 = vsel %vm2092, %v2095, %v2098
        %v2100 = vsel %vm2089, nan, %v2099
        %v2101 = vand.u32 2147483647, %v1771
        %vm2102 = vcmp.le.f32.partialorder %v2101, 0.7853982
        %vm2103 = vcmp.lt.s32.totalorder %v1771, 0
        %v2104 = vand.u32 %v1771, 2139095040
        %v2105 = vshrl.u32 %v2104, 23
        %v2106 = vsub.s32 %v2105, 127
        %v2107 = vand.u32 2147483647, %v1771
        %v2108 = vand.u32 %v2107, 8388607
        %v2109 = vor.u32 %v2108, 8388608
        %v2110 = vsub.s32 0, %v2109
        %v2111 = vadd.s32 %v2106, 1
        %vm2112 = vcmp.gt.s32.totalorder %v2111, 0
        %v2113 = vsel %vm2112, %v2111, 0
        %v2114 = vshrl.u32 %v2113, 5
        %v2115 = vand.u32 %v2113, 31
        %v2116 = vsub.s32 32, %v2115
        %v2117 = vshrl.u32 683565275, %v2116
        %v2118 = vshll.u32 683565275, %v2115
        %v2119 = vshrl.u32 2475754826, %v2116
        %v2120 = vor.u32 %v2118, %v2119
        %v2121 = vshll.u32 2475754826, %v2115
        %v2122 = vshrl.u32 2131351028, %v2116
        %v2123 = vor.u32 %v2121, %v2122
        %v2124 = vshll.u32 2131351028, %v2115
        %v2125 = vshrl.u32 2102212464, %v2116
        %v2126 = vor.u32 %v2124, %v2125
        %v2127 = vshll.u32 2102212464, %v2115
        %v2128 = vshrl.u32 920167782, %v2116
        %v2129 = vor.u32 %v2127, %v2128
        %v2130 = vshll.u32 920167782, %v2115
        %v2131 = vshrl.u32 1326507024, %v2116
        %v2132 = vor.u32 %v2130, %v2131
        %vm2133 = vcmp.lt.s32.totalorder %v2114, 1
        %vm2134 = vcmp.lt.s32.totalorder %v2114, 2
        %vm2135 = vcmp.lt.s32.totalorder %v2114, 3
        %vm2136 = vcmp.lt.s32.totalorder %v2114, 4
        %v2137 = vsel %vm2133, %v2117, %v2120
        %v2138 = vsel %vm2136, %v2126, 2102212464
        %v2139 = vsel %vm2135, %v2123, %v2138
        %v2140 = vsel %vm2134, %v2137, %v2139
        %v2141 = vsel %vm2133, %v2120, %v2123
        %v2142 = vsel %vm2136, %v2129, 920167782
        %v2143 = vsel %vm2135, %v2126, %v2142
        %v2144 = vsel %vm2134, %v2141, %v2143
        %v2145 = vsel %vm2133, %v2123, %v2126
        %v2146 = vsel %vm2136, %v2132, 1326507024
        %v2147 = vsel %vm2135, %v2129, %v2146
        %v2148 = vsel %vm2134, %v2145, %v2147
        %v2149 = vshll.u32 %v2109, 8
        %v2150 = vmul.u32.u64.compose %v2149, %v2148
        %v2151 = vextract.low.u32 %v2150
        %v2152 = vextract.high.u32 %v2150
        %v2153 = vmul.u32.u64.compose %v2149, %v2144
        %v2154 = vextract.low.u32 %v2153
        %v2155 = vextract.high.u32 %v2153
        %v2156 = vmul.u32 %v2149, %v2140
        %v2157 = vadd.s32 %v2152, %v2154
        %vm2158 = vc.u32 %v2152, %v2154
        %v2159 = vadd.s32 %v2155, 1
        %v2160 = vsel %vm2158, %v2159, %v2155
        %v2161 = vadd.s32 %v2156, %v2160
        %v2162 = vadd.s32 %v2161, 536870912
        %v2163 = vshrl.u32 %v2162, 30
        %v2164 = vshll.u32 %v2163, 30
        %v2165 = vsub.s32 %v2161, %v2164
        %vm2166 = vcmp.lt.s32.totalorder %v2165, 0
        %v2167 = vsub.s32 0, %v2165
        %v2168 = vsel %vm2166, %v2167, %v2165
        %v2169 = vclz %v2168
        %v2170 = vsub.s32 %v2169, 2
        %vm2171 = vcmp.gt.s32.totalorder 0, %v2170
        %v2172 = vsel %vm2171, 0, %v2170
        %v2173 = vsub.s32 32, %v2172
        %v2174 = vshll.u32 %v2165, %v2172
        %v2175 = vshrl.u32 %v2157, %v2173
        %v2176 = vor.u32 %v2174, %v2175
        %v2177 = vsub.s32 4294967266, %v2172
        %v2178 = vadd.s32 %v2177, 127
        %v2179 = vshll.u32 %v2178, 23
        %v2180 = vor.u32 4788187, %v2179
        %v2181 = vand.u32 2147483647, %v2180
        %v2183 = vcvt.s32.f32 %v2176
        %v2184 = vmul.f32 %v2183, %v2181
        %v2185 = vxor.u32 %v2184, 2147483648
        %v2186 = vsel %vm2103, %v2185, %v2184
        %v2187 = vsub.s32 4, %v2163
        %v2188 = vsel %vm2103, %v2187, %v2163
        %v2189 = vsel %vm2102, %v1771, %v2186
        %v2190 = vsel %vm2102, 0, %v2188
        %v2191 = vcosq.f32.pop %v2189
        %v2192 = vsinq.f32.pop %v2189
        %vm2193 = vweird.f32 %v1771
        %v2194 = vadd.s32 %v2190, 3
        %v2195 = vand.u32 %v2194, 3
        %vm2196 = vcmp.lt.s32.totalorder %v2195, 2
        %vm2197 = vcmp.eq.s32.totalorder %v2195, 0
        %v2198 = vxor.u32 %v2192, 2147483648
        %v2199 = vsel %vm2197, %v2191, %v2198
        %vm2200 = vcmp.eq.s32.totalorder %v2195, 2
        %v2201 = vxor.u32 %v2191, 2147483648
        %v2202 = vsel %vm2200, %v2201, %v2192
        %v2203 = vsel %vm2196, %v2199, %v2202
        %v2204 = vsel %vm2193, nan, %v2203
        %v2205 = vand.u32 2147483647, %v1776
        %vm2206 = vcmp.le.f32.partialorder %v2205, 0.7853982
        %vm2207 = vcmp.lt.s32.totalorder %v1776, 0
        %v2208 = vand.u32 %v1776, 2139095040
        %v2209 = vshrl.u32 %v2208, 23
        %v2210 = vsub.s32 %v2209, 127
        %v2211 = vand.u32 2147483647, %v1776
        %v2212 = vand.u32 %v2211, 8388607
        %v2213 = vor.u32 %v2212, 8388608
        %v2214 = vsub.s32 0, %v2213
        %v2215 = vadd.s32 %v2210, 1
        %vm2216 = vcmp.gt.s32.totalorder %v2215, 0
        %v2217 = vsel %vm2216, %v2215, 0
        %v2218 = vshrl.u32 %v2217, 5
        %v2219 = vand.u32 %v2217, 31
        %v2220 = vsub.s32 32, %v2219
        %v2221 = vshrl.u32 683565275, %v2220
        %v2222 = vshll.u32 683565275, %v2219
        %v2223 = vshrl.u32 2475754826, %v2220
        %v2224 = vor.u32 %v2222, %v2223
        %v2225 = vshll.u32 2475754826, %v2219
        %v2226 = vshrl.u32 2131351028, %v2220
        %v2227 = vor.u32 %v2225, %v2226
        %v2228 = vshll.u32 2131351028, %v2219
        %v2229 = vshrl.u32 2102212464, %v2220
        %v2230 = vor.u32 %v2228, %v2229
        %v2231 = vshll.u32 2102212464, %v2219
        %v2232 = vshrl.u32 920167782, %v2220
        %v2233 = vor.u32 %v2231, %v2232
        %v2234 = vshll.u32 920167782, %v2219
        %v2235 = vshrl.u32 1326507024, %v2220
        %v2236 = vor.u32 %v2234, %v2235
        %vm2237 = vcmp.lt.s32.totalorder %v2218, 1
        %vm2238 = vcmp.lt.s32.totalorder %v2218, 2
        %vm2239 = vcmp.lt.s32.totalorder %v2218, 3
        %vm2240 = vcmp.lt.s32.totalorder %v2218, 4
        %v2241 = vsel %vm2237, %v2221, %v2224
        %v2242 = vsel %vm2240, %v2230, 2102212464
        %v2243 = vsel %vm2239, %v2227, %v2242
        %v2244 = vsel %vm2238, %v2241, %v2243
        %v2245 = vsel %vm2237, %v2224, %v2227
        %v2246 = vsel %vm2240, %v2233, 920167782
        %v2247 = vsel %vm2239, %v2230, %v2246
        %v2248 = vsel %vm2238, %v2245, %v2247
        %v2249 = vsel %vm2237, %v2227, %v2230
        %v2250 = vsel %vm2240, %v2236, 1326507024
        %v2251 = vsel %vm2239, %v2233, %v2250
        %v2252 = vsel %vm2238, %v2249, %v2251
        %v2253 = vshll.u32 %v2213, 8
        %v2254 = vmul.u32.u64.compose %v2253, %v2252
        %v2255 = vextract.low.u32 %v2254
        %v2256 = vextract.high.u32 %v2254
        %v2257 = vmul.u32.u64.compose %v2253, %v2248
        %v2258 = vextract.low.u32 %v2257
        %v2259 = vextract.high.u32 %v2257
        %v2260 = vmul.u32 %v2253, %v2244
        %v2261 = vadd.s32 %v2256, %v2258
        %vm2262 = vc.u32 %v2256, %v2258
        %v2263 = vadd.s32 %v2259, 1
        %v2264 = vsel %vm2262, %v2263, %v2259
        %v2265 = vadd.s32 %v2260, %v2264
        %v2266 = vadd.s32 %v2265, 536870912
        %v2267 = vshrl.u32 %v2266, 30
        %v2268 = vshll.u32 %v2267, 30
        %v2269 = vsub.s32 %v2265, %v2268
        %vm2270 = vcmp.lt.s32.totalorder %v2269, 0
        %v2271 = vsub.s32 0, %v2269
        %v2272 = vsel %vm2270, %v2271, %v2269
        %v2273 = vclz %v2272
        %v2274 = vsub.s32 %v2273, 2
        %vm2275 = vcmp.gt.s32.totalorder 0, %v2274
        %v2276 = vsel %vm2275, 0, %v2274
        %v2277 = vsub.s32 32, %v2276
        %v2278 = vshll.u32 %v2269, %v2276
        %v2279 = vshrl.u32 %v2261, %v2277
        %v2280 = vor.u32 %v2278, %v2279
        %v2281 = vsub.s32 4294967266, %v2276
        %v2282 = vadd.s32 %v2281, 127
        %v2283 = vshll.u32 %v2282, 23
        %v2284 = vor.u32 4788187, %v2283
        %v2285 = vand.u32 2147483647, %v2284
        %v2287 = vcvt.s32.f32 %v2280
        %v2288 = vmul.f32 %v2287, %v2285
        %v2289 = vxor.u32 %v2288, 2147483648
        %v2290 = vsel %vm2207, %v2289, %v2288
        %v2291 = vsub.s32 4, %v2267
        %v2292 = vsel %vm2207, %v2291, %v2267
        %v2293 = vsel %vm2206, %v1776, %v2290
        %v2294 = vsel %vm2206, 0, %v2292
        %v2295 = vcosq.f32.pop %v2293
        %v2296 = vsinq.f32.pop %v2293
        %vm2297 = vweird.f32 %v1776
        %v2298 = vadd.s32 %v2294, 3
        %v2299 = vand.u32 %v2298, 3
        %vm2300 = vcmp.lt.s32.totalorder %v2299, 2
        %vm2301 = vcmp.eq.s32.totalorder %v2299, 0
        %v2302 = vxor.u32 %v2296, 2147483648
        %v2303 = vsel %vm2301, %v2295, %v2302
        %vm2304 = vcmp.eq.s32.totalorder %v2299, 2
        %v2305 = vxor.u32 %v2295, 2147483648
        %v2306 = vsel %vm2304, %v2305, %v2296
        %v2307 = vsel %vm2300, %v2303, %v2306
        %v2308 = vsel %vm2297, nan, %v2307
        %v2309 = vand.u32 2147483647, %v1781
        %vm2310 = vcmp.le.f32.partialorder %v2309, 0.7853982
        %vm2311 = vcmp.lt.s32.totalorder %v1781, 0
        %v2312 = vand.u32 %v1781, 2139095040
        %v2313 = vshrl.u32 %v2312, 23
        %v2314 = vsub.s32 %v2313, 127
        %v2315 = vand.u32 2147483647, %v1781
        %v2316 = vand.u32 %v2315, 8388607
        %v2317 = vor.u32 %v2316, 8388608
        %v2318 = vsub.s32 0, %v2317
        %v2319 = vadd.s32 %v2314, 1
        %vm2320 = vcmp.gt.s32.totalorder %v2319, 0
        %v2321 = vsel %vm2320, %v2319, 0
        %v2322 = vshrl.u32 %v2321, 5
        %v2323 = vand.u32 %v2321, 31
        %v2324 = vsub.s32 32, %v2323
        %v2325 = vshrl.u32 683565275, %v2324
        %v2326 = vshll.u32 683565275, %v2323
        %v2327 = vshrl.u32 2475754826, %v2324
        %v2328 = vor.u32 %v2326, %v2327
        %v2329 = vshll.u32 2475754826, %v2323
        %v2330 = vshrl.u32 2131351028, %v2324
        %v2331 = vor.u32 %v2329, %v2330
        %v2332 = vshll.u32 2131351028, %v2323
        %v2333 = vshrl.u32 2102212464, %v2324
        %v2334 = vor.u32 %v2332, %v2333
        %v2335 = vshll.u32 2102212464, %v2323
        %v2336 = vshrl.u32 920167782, %v2324
        %v2337 = vor.u32 %v2335, %v2336
        %v2338 = vshll.u32 920167782, %v2323
        %v2339 = vshrl.u32 1326507024, %v2324
        %v2340 = vor.u32 %v2338, %v2339
        %vm2341 = vcmp.lt.s32.totalorder %v2322, 1
        %vm2342 = vcmp.lt.s32.totalorder %v2322, 2
        %vm2343 = vcmp.lt.s32.totalorder %v2322, 3
        %vm2344 = vcmp.lt.s32.totalorder %v2322, 4
        %v2345 = vsel %vm2341, %v2325, %v2328
        %v2346 = vsel %vm2344, %v2334, 2102212464
        %v2347 = vsel %vm2343, %v2331, %v2346
        %v2348 = vsel %vm2342, %v2345, %v2347
        %v2349 = vsel %vm2341, %v2328, %v2331
        %v2350 = vsel %vm2344, %v2337, 920167782
        %v2351 = vsel %vm2343, %v2334, %v2350
        %v2352 = vsel %vm2342, %v2349, %v2351
        %v2353 = vsel %vm2341, %v2331, %v2334
        %v2354 = vsel %vm2344, %v2340, 1326507024
        %v2355 = vsel %vm2343, %v2337, %v2354
        %v2356 = vsel %vm2342, %v2353, %v2355
        %v2357 = vshll.u32 %v2317, 8
        %v2358 = vmul.u32.u64.compose %v2357, %v2356
        %v2359 = vextract.low.u32 %v2358
        %v2360 = vextract.high.u32 %v2358
        %v2361 = vmul.u32.u64.compose %v2357, %v2352
        %v2362 = vextract.low.u32 %v2361
        %v2363 = vextract.high.u32 %v2361
        %v2364 = vmul.u32 %v2357, %v2348
        %v2365 = vadd.s32 %v2360, %v2362
        %vm2366 = vc.u32 %v2360, %v2362
        %v2367 = vadd.s32 %v2363, 1
        %v2368 = vsel %vm2366, %v2367, %v2363
        %v2369 = vadd.s32 %v2364, %v2368
        %v2370 = vadd.s32 %v2369, 536870912
        %v2371 = vshrl.u32 %v2370, 30
        %v2372 = vshll.u32 %v2371, 30
        %v2373 = vsub.s32 %v2369, %v2372
        %vm2374 = vcmp.lt.s32.totalorder %v2373, 0
        %v2375 = vsub.s32 0, %v2373
        %v2376 = vsel %vm2374, %v2375, %v2373
        %v2377 = vclz %v2376
        %v2378 = vsub.s32 %v2377, 2
        %vm2379 = vcmp.gt.s32.totalorder 0, %v2378
        %v2380 = vsel %vm2379, 0, %v2378
        %v2381 = vsub.s32 32, %v2380
        %v2382 = vshll.u32 %v2373, %v2380
        %v2383 = vshrl.u32 %v2365, %v2381
        %v2384 = vor.u32 %v2382, %v2383
        %v2385 = vsub.s32 4294967266, %v2380
        %v2386 = vadd.s32 %v2385, 127
        %v2387 = vshll.u32 %v2386, 23
        %v2388 = vor.u32 4788187, %v2387
        %v2389 = vand.u32 2147483647, %v2388
        %v2391 = vcvt.s32.f32 %v2384
        %v2392 = vmul.f32 %v2391, %v2389
        %v2393 = vxor.u32 %v2392, 2147483648
        %v2394 = vsel %vm2311, %v2393, %v2392
        %v2395 = vsub.s32 4, %v2371
        %v2396 = vsel %vm2311, %v2395, %v2371
        %v2397 = vsel %vm2310, %v1781, %v2394
        %v2398 = vsel %vm2310, 0, %v2396
        %v2399 = vcosq.f32.pop %v2397
        %v2400 = vsinq.f32.pop %v2397
        %vm2401 = vweird.f32 %v1781
        %v2402 = vadd.s32 %v2398, 3
        %v2403 = vand.u32 %v2402, 3
        %vm2404 = vcmp.lt.s32.totalorder %v2403, 2
        %vm2405 = vcmp.eq.s32.totalorder %v2403, 0
        %v2406 = vxor.u32 %v2400, 2147483648
        %v2407 = vsel %vm2405, %v2399, %v2406
        %vm2408 = vcmp.eq.s32.totalorder %v2403, 2
        %v2409 = vxor.u32 %v2399, 2147483648
        %v2410 = vsel %vm2408, %v2409, %v2400
        %v2411 = vsel %vm2404, %v2407, %v2410
        %v2412 = vsel %vm2401, nan, %v2411
        %v2413 = vand.u32 2147483647, %v1786
        %vm2414 = vcmp.le.f32.partialorder %v2413, 0.7853982
        %vm2415 = vcmp.lt.s32.totalorder %v1786, 0
        %v2416 = vand.u32 %v1786, 2139095040
        %v2417 = vshrl.u32 %v2416, 23
        %v2418 = vsub.s32 %v2417, 127
        %v2419 = vand.u32 2147483647, %v1786
        %v2420 = vand.u32 %v2419, 8388607
        %v2421 = vor.u32 %v2420, 8388608
        %v2422 = vsub.s32 0, %v2421
        %v2423 = vadd.s32 %v2418, 1
        %vm2424 = vcmp.gt.s32.totalorder %v2423, 0
        %v2425 = vsel %vm2424, %v2423, 0
        %v2426 = vshrl.u32 %v2425, 5
        %v2427 = vand.u32 %v2425, 31
        %v2428 = vsub.s32 32, %v2427
        %v2429 = vshrl.u32 683565275, %v2428
        %v2430 = vshll.u32 683565275, %v2427
        %v2431 = vshrl.u32 2475754826, %v2428
        %v2432 = vor.u32 %v2430, %v2431
        %v2433 = vshll.u32 2475754826, %v2427
        %v2434 = vshrl.u32 2131351028, %v2428
        %v2435 = vor.u32 %v2433, %v2434
        %v2436 = vshll.u32 2131351028, %v2427
        %v2437 = vshrl.u32 2102212464, %v2428
        %v2438 = vor.u32 %v2436, %v2437
        %v2439 = vshll.u32 2102212464, %v2427
        %v2440 = vshrl.u32 920167782, %v2428
        %v2441 = vor.u32 %v2439, %v2440
        %v2442 = vshll.u32 920167782, %v2427
        %v2443 = vshrl.u32 1326507024, %v2428
        %v2444 = vor.u32 %v2442, %v2443
        %vm2445 = vcmp.lt.s32.totalorder %v2426, 1
        %vm2446 = vcmp.lt.s32.totalorder %v2426, 2
        %vm2447 = vcmp.lt.s32.totalorder %v2426, 3
        %vm2448 = vcmp.lt.s32.totalorder %v2426, 4
        %v2449 = vsel %vm2445, %v2429, %v2432
        %v2450 = vsel %vm2448, %v2438, 2102212464
        %v2451 = vsel %vm2447, %v2435, %v2450
        %v2452 = vsel %vm2446, %v2449, %v2451
        %v2453 = vsel %vm2445, %v2432, %v2435
        %v2454 = vsel %vm2448, %v2441, 920167782
        %v2455 = vsel %vm2447, %v2438, %v2454
        %v2456 = vsel %vm2446, %v2453, %v2455
        %v2457 = vsel %vm2445, %v2435, %v2438
        %v2458 = vsel %vm2448, %v2444, 1326507024
        %v2459 = vsel %vm2447, %v2441, %v2458
        %v2460 = vsel %vm2446, %v2457, %v2459
        %v2461 = vshll.u32 %v2421, 8
        %v2462 = vmul.u32.u64.compose %v2461, %v2460
        %v2463 = vextract.low.u32 %v2462
        %v2464 = vextract.high.u32 %v2462
        %v2465 = vmul.u32.u64.compose %v2461, %v2456
        %v2466 = vextract.low.u32 %v2465
        %v2467 = vextract.high.u32 %v2465
        %v2468 = vmul.u32 %v2461, %v2452
        %v2469 = vadd.s32 %v2464, %v2466
        %vm2470 = vc.u32 %v2464, %v2466
        %v2471 = vadd.s32 %v2467, 1
        %v2472 = vsel %vm2470, %v2471, %v2467
        %v2473 = vadd.s32 %v2468, %v2472
        %v2474 = vadd.s32 %v2473, 536870912
        %v2475 = vshrl.u32 %v2474, 30
        %v2476 = vshll.u32 %v2475, 30
        %v2477 = vsub.s32 %v2473, %v2476
        %vm2478 = vcmp.lt.s32.totalorder %v2477, 0
        %v2479 = vsub.s32 0, %v2477
        %v2480 = vsel %vm2478, %v2479, %v2477
        %v2481 = vclz %v2480
        %v2482 = vsub.s32 %v2481, 2
        %vm2483 = vcmp.gt.s32.totalorder 0, %v2482
        %v2484 = vsel %vm2483, 0, %v2482
        %v2485 = vsub.s32 32, %v2484
        %v2486 = vshll.u32 %v2477, %v2484
        %v2487 = vshrl.u32 %v2469, %v2485
        %v2488 = vor.u32 %v2486, %v2487
        %v2489 = vsub.s32 4294967266, %v2484
        %v2490 = vadd.s32 %v2489, 127
        %v2491 = vshll.u32 %v2490, 23
        %v2492 = vor.u32 4788187, %v2491
        %v2493 = vand.u32 2147483647, %v2492
        %v2495 = vcvt.s32.f32 %v2488
        %v2496 = vmul.f32 %v2495, %v2493
        %v2497 = vxor.u32 %v2496, 2147483648
        %v2498 = vsel %vm2415, %v2497, %v2496
        %v2499 = vsub.s32 4, %v2475
        %v2500 = vsel %vm2415, %v2499, %v2475
        %v2501 = vsel %vm2414, %v1786, %v2498
        %v2502 = vsel %vm2414, 0, %v2500
        %v2503 = vcosq.f32.pop %v2501
        %v2504 = vsinq.f32.pop %v2501
        %vm2505 = vweird.f32 %v1786
        %v2506 = vadd.s32 %v2502, 3
        %v2507 = vand.u32 %v2506, 3
        %vm2508 = vcmp.lt.s32.totalorder %v2507, 2
        %vm2509 = vcmp.eq.s32.totalorder %v2507, 0
        %v2510 = vxor.u32 %v2504, 2147483648
        %v2511 = vsel %vm2509, %v2503, %v2510
        %vm2512 = vcmp.eq.s32.totalorder %v2507, 2
        %v2513 = vxor.u32 %v2503, 2147483648
        %v2514 = vsel %vm2512, %v2513, %v2504
        %v2515 = vsel %vm2508, %v2511, %v2514
        %v2516 = vsel %vm2505, nan, %v2515
        %v2517 = vpack.c.bf16 %v1996, %v1892
        %v2518 = vpack.c.bf16 %v2204, %v2100
        %v2519 = vpack.c.bf16 %v2412, %v2308
        %v2520 = vpack.c.bf16 %v2516, %v2516
        %v2521 = vpack.c.bf16 %v1657, %v1655
        %v2522 = vpack.c.bf16 %v1661, %v1659
        %v2523 = vpack.c.bf16 %v1665, %v1663
        %v2524 = vpack.c.bf16 %v1667, %v1667
        %v2526 = vsel %vm387, %v2521, 0
        %v2529 = vsel %vm387, %v2522, 0
        %v2532 = vsel %vm387, %v2523, 0
        %v2535 = vsel %vm387, %v2524, 0
        %2537 = vmatprep.subr.bf16.mxu0 0
        %2538 = vmatpush1.bf16.msra.mxu0 %v1270
        %2539 = vmatprep.subr.bf16.mxu0 0
        %2540 = vmatpush1.bf16.msra.mxu0 0
        %2541 = vmatprep.subr.bf16.mxu0 0
        %2542 = vmatpush1.bf16.msra.mxu0 0
        %2543 = vmatprep.subr.bf16.mxu0 0
        %2544 = vmatpush1.bf16.msra.mxu0 0
        %2545 = vmatprep.subr.bf16.mxu0 0
        %2546 = vmatpush1.bf16.msra.mxu0 0
        %2547 = vmatprep.subr.bf16.mxu0 0
        %2548 = vmatpush1.bf16.msra.mxu0 0
        %2549 = vmatprep.subr.bf16.mxu0 0
        %2550 = vmatpush1.bf16.msra.mxu0 0
        %2551 = vmatprep.subr.bf16.mxu0 0
        %2552 = vmatpush1.bf16.msra.mxu0 0
        %2553 = vmatprep.subr.bf16.mxu0 0
        %2554 = vmatpush1.bf16.msra.mxu0 0
        %2555 = vmatprep.subr.bf16.mxu0 0
        %2556 = vmatpush1.bf16.msra.mxu0 0
        %2557 = vmatprep.subr.bf16.mxu0 0
        %2558 = vmatpush1.bf16.msra.mxu0 0
        %2559 = vmatprep.subr.bf16.mxu0 0
        %2560 = vmatpush1.bf16.msra.mxu0 0
        %2561 = vmatprep.subr.bf16.mxu0 0
        %2562 = vmatpush1.bf16.msra.mxu0 0
        %2563 = vmatprep.subr.bf16.mxu0 0
        %2564 = vmatpush1.bf16.msra.mxu0 0
        %2565 = vmatprep.subr.bf16.mxu0 0
        %2566 = vmatpush1.bf16.msra.mxu0 0
        %2567 = vmatprep.subr.bf16.mxu0 0
        %2568 = vmatpush1.bf16.msra.mxu0 0
        %2569 = vmatprep.mubr.bf16.mxu0 0
        %2570 = vmatmul.mubr.bf16.gmra.mrb[0].mxu0 %v2526
        %v2571 = vpop.f32.mrb[0].mxu0
        %v2572 = vadd.f32 0.0, %v2571
        %v2573 = vpop.f32.mrb[0].mxu0
        %v2574 = vpop.f32.mrb[0].mxu0
        %v2575 = vadd.f32 0.0, %v2574
        %v2576 = vpop.f32.mrb[0].mxu0
        %2577 = vmatprep.mubr.bf16.mxu0 0
        %2578 = vmatmul.mubr.bf16.gmra.mrb[0].mxu0 %v2529
        %v2579 = vpop.f32.mrb[0].mxu0
        %v2580 = vadd.f32 0.0, %v2579
        %v2581 = vpop.f32.mrb[0].mxu0
        %v2582 = vpop.f32.mrb[0].mxu0
        %v2583 = vadd.f32 0.0, %v2582
        %v2584 = vpop.f32.mrb[0].mxu0
        %2585 = vmatprep.mubr.bf16.mxu0 0
        %2586 = vmatmul.mubr.bf16.gmra.mrb[0].mxu0 %v2532
        %v2587 = vpop.f32.mrb[0].mxu0
        %v2588 = vadd.f32 0.0, %v2587
        %v2589 = vpop.f32.mrb[0].mxu0
        %v2590 = vpop.f32.mrb[0].mxu0
        %v2591 = vadd.f32 0.0, %v2590
        %v2592 = vpop.f32.mrb[0].mxu0
        %2593 = vmatprep.mubr.bf16.mxu0 0
        %2594 = vmatmul.mubr.bf16.gmra.mrb[0].mxu0 %v2535
        %v2595 = vpop.f32.mrb[0].mxu0
        %v2596 = vadd.f32 0.0, %v2595
        %v2597 = vpop.f32.mrb[0].mxu0
        %v2598 = vpop.f32.mrb[0].mxu0
        %v2599 = vpop.f32.mrb[0].mxu0
        %2600 = vdwg.mxu0
        %v2602 = vsel %vm1345, %v2517, 0
        %v2605 = vsel %vm1345, %v2518, 0
        %v2608 = vsel %vm1345, %v2519, 0
        %v2611 = vsel %vm1345, %v2520, 0
        %2613 = vmatprep.subr.bf16.mxu0 0
        %2614 = vmatpush1.bf16.msra.mxu0 %v1342
        %2615 = vmatprep.subr.bf16.mxu0 0
        %2616 = vmatpush1.bf16.msra.mxu0 %v1360
        %2617 = vmatprep.subr.bf16.mxu0 0
        %2618 = vmatpush1.bf16.msra.mxu0 0
        %2619 = vmatprep.subr.bf16.mxu0 0
        %2620 = vmatpush1.bf16.msra.mxu0 0
        %2621 = vmatprep.subr.bf16.mxu0 0
        %2622 = vmatpush1.bf16.msra.mxu0 0
        %2623 = vmatprep.subr.bf16.mxu0 0
        %2624 = vmatpush1.bf16.msra.mxu0 0
        %2625 = vmatprep.subr.bf16.mxu0 0
        %2626 = vmatpush1.bf16.msra.mxu0 0
        %2627 = vmatprep.subr.bf16.mxu0 0
        %2628 = vmatpush1.bf16.msra.mxu0 0
        %2629 = vmatprep.subr.bf16.mxu0 0
        %2630 = vmatpush1.bf16.msra.mxu0 0
        %2631 = vmatprep.subr.bf16.mxu0 0
        %2632 = vmatpush1.bf16.msra.mxu0 0
        %2633 = vmatprep.subr.bf16.mxu0 0
        %2634 = vmatpush1.bf16.msra.mxu0 0
        %2635 = vmatprep.subr.bf16.mxu0 0
        %2636 = vmatpush1.bf16.msra.mxu0 0
        %2637 = vmatprep.subr.bf16.mxu0 0
        %2638 = vmatpush1.bf16.msra.mxu0 0
        %2639 = vmatprep.subr.bf16.mxu0 0
        %2640 = vmatpush1.bf16.msra.mxu0 0
        %2641 = vmatprep.subr.bf16.mxu0 0
        %2642 = vmatpush1.bf16.msra.mxu0 0
        %2643 = vmatprep.subr.bf16.mxu0 0
        %2644 = vmatpush1.bf16.msra.mxu0 0
        %2645 = vmatprep.mubr.bf16.mxu0 0
        %2646 = vmatmul.mubr.bf16.gmra.mrb[0].mxu0 %v2602
        %v2647 = vpop.f32.mrb[0].mxu0
        %v2648 = vadd.f32 %v2572, %v2647
        %v2649 = vpop.f32.mrb[0].mxu0
        %v2650 = vpop.f32.mrb[0].mxu0
        %v2651 = vadd.f32 %v2575, %v2650
        %v2652 = vpop.f32.mrb[0].mxu0
        %2653 = vmatprep.mubr.bf16.mxu0 0
        %2654 = vmatmul.mubr.bf16.gmra.mrb[0].mxu0 %v2605
        %v2655 = vpop.f32.mrb[0].mxu0
        %v2656 = vadd.f32 %v2580, %v2655
        %v2657 = vpop.f32.mrb[0].mxu0
        %v2658 = vpop.f32.mrb[0].mxu0
        %v2659 = vadd.f32 %v2583, %v2658
        %v2660 = vpop.f32.mrb[0].mxu0
        %2661 = vmatprep.mubr.bf16.mxu0 0
        %2662 = vmatmul.mubr.bf16.gmra.mrb[0].mxu0 %v2608
        %v2663 = vpop.f32.mrb[0].mxu0
        %v2664 = vadd.f32 %v2588, %v2663
        %v2665 = vpop.f32.mrb[0].mxu0
        %v2666 = vpop.f32.mrb[0].mxu0
        %v2667 = vadd.f32 %v2591, %v2666
        %v2668 = vpop.f32.mrb[0].mxu0
        %2669 = vmatprep.mubr.bf16.mxu0 0
        %2670 = vmatmul.mubr.bf16.gmra.mrb[0].mxu0 %v2611
        %v2671 = vpop.f32.mrb[0].mxu0
        %v2672 = vadd.f32 %v2596, %v2671
        %v2673 = vpop.f32.mrb[0].mxu0
        %v2674 = vpop.f32.mrb[0].mxu0
        %v2675 = vpop.f32.mrb[0].mxu0
        %2676 = vdwg.mxu0
        %v2677 = vadd.f32 %v2648, %v1431
        %v2678 = vadd.f32 %v2651, %v1431
        %v2679 = vadd.f32 %v2656, %v1431
        %v2680 = vadd.f32 %v2659, %v1431
        %v2681 = vadd.f32 %v2664, %v1431
        %v2682 = vadd.f32 %v2667, %v1431
        %v2683 = vadd.f32 %v2672, %v1431
        %v2684 = vmax.f32 %v2677, 0.0
        %v2685 = vmax.f32 %v2678, 0.0
        %v2686 = vmax.f32 %v2679, 0.0
        %v2687 = vmax.f32 %v2680, 0.0
        %v2688 = vmax.f32 %v2681, 0.0
        %v2689 = vmax.f32 %v2682, 0.0
        %v2690 = vmax.f32 %v2683, 0.0
        %v2691 = vpack.c.bf16 %v2685, %v2684
        %v2692 = vpack.c.bf16 %v2687, %v2686
        %v2693 = vpack.c.bf16 %v2689, %v2688
        %v2694 = vpack.c.bf16 %v2690, %v2690
        %v2696 = vsel %vm1466, %v2691, 0
        %v2699 = vsel %vm1466, %v2692, 0
        %v2702 = vsel %vm1466, %v2693, 0
        %v2705 = vsel %vm1466, %v2694, 0
        %2707 = vmatprep.subr.bf16.mxu0 0
        %2708 = vmatpush1.bf16.msra.mxu0 %v1464
        %2709 = vmatprep.subr.bf16.mxu0 0
        %2710 = vmatpush1.bf16.msra.mxu0 0
        %2711 = vmatprep.subr.bf16.mxu0 0
        %2712 = vmatpush1.bf16.msra.mxu0 0
        %2713 = vmatprep.subr.bf16.mxu0 0
        %2714 = vmatpush1.bf16.msra.mxu0 0
        %2715 = vmatprep.subr.bf16.mxu0 0
        %2716 = vmatpush1.bf16.msra.mxu0 0
        %2717 = vmatprep.subr.bf16.mxu0 0
        %2718 = vmatpush1.bf16.msra.mxu0 0
        %2719 = vmatprep.subr.bf16.mxu0 0
        %2720 = vmatpush1.bf16.msra.mxu0 0
        %2721 = vmatprep.subr.bf16.mxu0 0
        %2722 = vmatpush1.bf16.msra.mxu0 0
        %2723 = vmatprep.subr.bf16.mxu0 0
        %2724 = vmatpush1.bf16.msra.mxu0 0
        %2725 = vmatprep.subr.bf16.mxu0 0
        %2726 = vmatpush1.bf16.msra.mxu0 0
        %2727 = vmatprep.subr.bf16.mxu0 0
        %2728 = vmatpush1.bf16.msra.mxu0 0
        %2729 = vmatprep.subr.bf16.mxu0 0
        %2730 = vmatpush1.bf16.msra.mxu0 0
        %2731 = vmatprep.subr.bf16.mxu0 0
        %2732 = vmatpush1.bf16.msra.mxu0 0
        %2733 = vmatprep.subr.bf16.mxu0 0
        %2734 = vmatpush1.bf16.msra.mxu0 0
        %2735 = vmatprep.subr.bf16.mxu0 0
        %2736 = vmatpush1.bf16.msra.mxu0 0
        %2737 = vmatprep.subr.bf16.mxu0 0
        %2738 = vmatpush1.bf16.msra.mxu0 0
        %2739 = vmatprep.mubr.bf16.mxu0 0
        %2740 = vmatmul.mubr.bf16.gmra.mrb[0].mxu0 %v2696
        %v2741 = vpop.f32.mrb[0].mxu0
        %v2742 = vadd.f32 %v1458, %v2741
        %v2743 = vpop.f32.mrb[0].mxu0
        %v2744 = vpop.f32.mrb[0].mxu0
        %v2745 = vadd.f32 %v1458, %v2744
        %v2746 = vpop.f32.mrb[0].mxu0
        %2747 = vmatprep.mubr.bf16.mxu0 0
        %2748 = vmatmul.mubr.bf16.gmra.mrb[0].mxu0 %v2699
        %v2749 = vpop.f32.mrb[0].mxu0
        %v2750 = vadd.f32 %v1458, %v2749
        %v2751 = vpop.f32.mrb[0].mxu0
        %v2752 = vpop.f32.mrb[0].mxu0
        %v2753 = vadd.f32 %v1458, %v2752
        %v2754 = vpop.f32.mrb[0].mxu0
        %2755 = vmatprep.mubr.bf16.mxu0 0
        %2756 = vmatmul.mubr.bf16.gmra.mrb[0].mxu0 %v2702
        %v2757 = vpop.f32.mrb[0].mxu0
        %v2758 = vadd.f32 %v1458, %v2757
        %v2759 = vpop.f32.mrb[0].mxu0
        %v2760 = vpop.f32.mrb[0].mxu0
        %v2761 = vadd.f32 %v1458, %v2760
        %v2762 = vpop.f32.mrb[0].mxu0
        %2763 = vmatprep.mubr.bf16.mxu0 0
        %2764 = vmatmul.mubr.bf16.gmra.mrb[0].mxu0 %v2705
        %v2765 = vpop.f32.mrb[0].mxu0
        %v2766 = vadd.f32 %v1458, %v2765
        %v2767 = vpop.f32.mrb[0].mxu0
        %v2768 = vpop.f32.mrb[0].mxu0
        %v2769 = vpop.f32.mrb[0].mxu0
        %2770 = vdwg.mxu0
        %v2771 = vmax.f32 %v2742, 0.0
        %v2772 = vmax.f32 %v2745, 0.0
        %v2773 = vmax.f32 %v2750, 0.0
        %v2774 = vmax.f32 %v2753, 0.0
        %v2775 = vmax.f32 %v2758, 0.0
        %v2776 = vmax.f32 %v2761, 0.0
        %v2777 = vmax.f32 %v2766, 0.0
        %v2778 = vpack.c.bf16 %v2772, %v2771
        %v2779 = vpack.c.bf16 %v2774, %v2773
        %v2780 = vpack.c.bf16 %v2776, %v2775
        %v2781 = vpack.c.bf16 %v2777, %v2777
        %v2783 = vsel %vm1577, %v2778, 0
        %v2786 = vsel %vm1577, %v2779, 0
        %v2789 = vsel %vm1577, %v2780, 0
        %v2792 = vsel %vm1577, %v2781, 0
        %2794 = vmatprep.subr.bf16.mxu0 0
        %2795 = vmatpush1.bf16.msra.mxu0 %v1573
        %2796 = vmatprep.subr.bf16.mxu0 0
        %2797 = vmatpush1.bf16.msra.mxu0 %v1574
        %2798 = vmatprep.subr.bf16.mxu0 0
        %2799 = vmatpush1.bf16.msra.mxu0 0
        %2800 = vmatprep.subr.bf16.mxu0 0
        %2801 = vmatpush1.bf16.msra.mxu0 0
        %2802 = vmatprep.subr.bf16.mxu0 0
        %2803 = vmatpush1.bf16.msra.mxu0 0
        %2804 = vmatprep.subr.bf16.mxu0 0
        %2805 = vmatpush1.bf16.msra.mxu0 0
        %2806 = vmatprep.subr.bf16.mxu0 0
        %2807 = vmatpush1.bf16.msra.mxu0 0
        %2808 = vmatprep.subr.bf16.mxu0 0
        %2809 = vmatpush1.bf16.msra.mxu0 0
        %2810 = vmatprep.subr.bf16.mxu0 0
        %2811 = vmatpush1.bf16.msra.mxu0 0
        %2812 = vmatprep.subr.bf16.mxu0 0
        %2813 = vmatpush1.bf16.msra.mxu0 0
        %2814 = vmatprep.subr.bf16.mxu0 0
        %2815 = vmatpush1.bf16.msra.mxu0 0
        %2816 = vmatprep.subr.bf16.mxu0 0
        %2817 = vmatpush1.bf16.msra.mxu0 0
        %2818 = vmatprep.subr.bf16.mxu0 0
        %2819 = vmatpush1.bf16.msra.mxu0 0
        %2820 = vmatprep.subr.bf16.mxu0 0
        %2821 = vmatpush1.bf16.msra.mxu0 0
        %2822 = vmatprep.subr.bf16.mxu0 0
        %2823 = vmatpush1.bf16.msra.mxu0 0
        %2824 = vmatprep.subr.bf16.mxu0 0
        %2825 = vmatpush1.bf16.msra.mxu0 0
        %2826 = vmatprep.mubr.bf16.mxu0 0
        %2827 = vmatmul.mubr.bf16.gmra.mrb[0].mxu0 %v2783
        %v2828 = vpop.f32.mrb[0].mxu0
        %v2829 = vadd.f32 %v1563, %v2828
        %v2830 = vpop.f32.mrb[0].mxu0
        %v2831 = vpop.f32.mrb[0].mxu0
        %v2832 = vadd.f32 %v1563, %v2831
        %v2833 = vpop.f32.mrb[0].mxu0
        %2834 = vmatprep.mubr.bf16.mxu0 0
        %2835 = vmatmul.mubr.bf16.gmra.mrb[0].mxu0 %v2786
        %v2836 = vpop.f32.mrb[0].mxu0
        %v2837 = vadd.f32 %v1563, %v2836
        %v2838 = vpop.f32.mrb[0].mxu0
        %v2839 = vpop.f32.mrb[0].mxu0
        %v2840 = vadd.f32 %v1563, %v2839
        %v2841 = vpop.f32.mrb[0].mxu0
        %2842 = vmatprep.mubr.bf16.mxu0 0
        %2843 = vmatmul.mubr.bf16.gmra.mrb[0].mxu0 %v2789
        %v2844 = vpop.f32.mrb[0].mxu0
        %v2845 = vadd.f32 %v1563, %v2844
        %v2846 = vpop.f32.mrb[0].mxu0
        %v2847 = vpop.f32.mrb[0].mxu0
        %v2848 = vadd.f32 %v1563, %v2847
        %v2849 = vpop.f32.mrb[0].mxu0
        %2850 = vmatprep.mubr.bf16.mxu0 0
        %2851 = vmatmul.mubr.bf16.gmra.mrb[0].mxu0 %v2792
        %v2852 = vpop.f32.mrb[0].mxu0
        %v2853 = vadd.f32 %v1563, %v2852
        %v2854 = vpop.f32.mrb[0].mxu0
        %v2855 = vpop.f32.mrb[0].mxu0
        %v2856 = vpop.f32.mrb[0].mxu0
        %2857 = vdwg.mxu0
        %2865 = vrot.lane.b32.xlu0 %v2829, 64
        %v2866 = vpop.permute.xlu0 %2865
        %2867 = vrot.lane.b32.xlu0 %v2832, 64
        %v2868 = vpop.permute.xlu0 %2867
        %2869 = vrot.lane.b32.xlu0 %v2837, 64
        %v2870 = vpop.permute.xlu0 %2869
        %2871 = vrot.lane.b32.xlu0 %v2840, 64
        %v2872 = vpop.permute.xlu0 %2871
        %2873 = vrot.lane.b32.xlu0 %v2845, 64
        %v2874 = vpop.permute.xlu0 %2873
        %2875 = vrot.lane.b32.xlu0 %v2848, 64
        %v2876 = vpop.permute.xlu0 %2875
        %2877 = vrot.lane.b32.xlu0 %v2853, 64
        %v2878 = vpop.permute.xlu0 %2877
        %vm2886 = vcmask 523264
        %v2887 = vsel %vm2886, %v1625, %v2866
        %v2888 = vsel %vm2886, %v1628, %v2868
        %v2889 = vsel %vm2886, %v1633, %v2870
        %v2890 = vsel %vm2886, %v1636, %v2872
        %v2891 = vsel %vm2886, %v1641, %v2874
        %v2892 = vsel %vm2886, %v1644, %v2876
        %v2893 = vsel %vm2886, %v1649, %v2878
        %2894 = vst [vmem:[%s353] sm:$0xff] %v2887
        %2895 = vst [vmem:[%s353 + $0x8] sm:$0xff] %v2888
        %2896 = vst [vmem:[%s353 + $0x10] sm:$0xff] %v2889
        %2897 = vst [vmem:[%s353 + $0x18] sm:$0xff] %v2890
        %2898 = vst [vmem:[%s353 + $0x20] sm:$0xff] %v2891
        %2899 = vst [vmem:[%s353 + $0x28] sm:$0xff] %v2892
        %2900 = vst [vmem:[%s353 + $0x30] sm:$0xff] %v2893
        %s2901 = sand.u32 %s247, 1
        %s2902 = scalar_lea.sflag [#allocation3], %s2901
        %s2903 = sand.u32 %s247, 1
        %s2904 = smul.addr %s2903, 56
        %s2905 = scalar_lea.vmem [#allocation2], %s2904
        // Predicated region
        $region61: #{tpu_custom_call.1} parent=59 // pred_check
          %p2906 = pneg %p257
        $region62: #{tpu_custom_call.1} parent=59 // pred_check_branch
          %2908 = sbr.rel (%p2906) target = $region64
        $region63: #{tpu_custom_call.1} parent=59 // pred_region
          %s2909 = smul.u32 7, %s24
          %s2910 = ssub.s32 8, %s2909
          %p2911 = scmp.lt.s32.totalorder %s2910, 7
          %s2912 = scalar_select %p2911, %s2910, 7
          %s2913 = smul.u32 128, %s2912
          %s2915 = ssub.s32 896, %s2913
          %2916 = vsyncadd %s2902, %s2915
          %p2917 = scmp.ne.s32.totalorder 0, %s2913
          %s2918 = smul.addr %s2909, 128
          %s2919 = scalar_lea.hbm %s10, %s2918
          %s2920 = smul.u32 8, %s2912
          %s2921 = sshll.u32 %s2905, 4
          %s2922 = int_to_ptr.vmem [resolvable:$true] %s2921
          %s2923 = sshll.u32 %s2920, 4
          %2927 = dma.vmem_to_hbm [thread:$0]  (%p2917), %s2922, %s2923, %s2919, %s2902, 128, 128, 8
        $region64: #{tpu_custom_call.1} parent=59 // pred_fallthru
          _
      $region60: #{tpu_custom_call.1} parent=5 // pred_fallthru
        _
      %p2928 = scmp.le.s32.totalorder 2, %s19
      // Predicated region
      $region65: #{tpu_custom_call.1} parent=5 // pred_check
        %p2929 = pneg %p2928
      $region66: #{tpu_custom_call.1} parent=5 // pred_check_branch
        %2931 = sbr.rel (%p2929) target = $region68
      $region67: #{tpu_custom_call.1} parent=5 // pred_region
        %s2932 = ssub.s32 %s19, 2
        // Predicated region
        $region69: #{tpu_custom_call.1} parent=67 // pred_check
          %p2933 = pneg %p263
        $region70: #{tpu_custom_call.1} parent=67 // pred_check_branch
          %2935 = sbr.rel (%p2933) target = $region72
        $region71: #{tpu_custom_call.1} parent=67 // pred_region
          %s2936 = sand.u32 %s248, 1
          %s2937 = scalar_lea.sflag [#allocation3], %s2936
          %s2938 = sand.u32 %s248, 1
          %s2939 = smul.addr %s2938, 56
          %s2940 = scalar_lea.vmem [#allocation2], %s2939
          %2941 = dma.done %s2937, 896
        $region72: #{tpu_custom_call.1} parent=67 // pred_fallthru
          _
      $region68: #{tpu_custom_call.1} parent=5 // pred_fallthru
        _
    $region6: #{tpu_custom_call.1} parent=1 // loop_footer
      %s23 = sadd.s32 1, %s19
    $region7: #{tpu_custom_call.1} parent=1 // loop_footer_branch
      %18 = sbr.rel target = $region3
    $region8: #{tpu_custom_call.1} parent=1 // loop_exit
      _
    %2942 = vsyncpa [#allocation3], 1
    %s2943 = scalar_lea.sflag [#allocation3], 1
    %2944 = vsyncpa %s2943, 1

</llo_original>
